<compile_context>
chip_gen: v7x
topology: tpu7x:2x2x1
jax: 0.10.0
libtpu: 0.0.40
codegen_flags: <defaults>
</compile_context>

<pallas_src>
import jax
import jax.numpy as jnp
import numpy as np
from jax.experimental import pallas as pl
from jax.experimental.pallas import tpu as pltpu

EPS = 1e-5  # nn.BatchNorm1d default eps


# ---------------------------------------------------------------------------
# Fused forward kernel (factory closes over the static configuration).
# ---------------------------------------------------------------------------
def _make_fused_kernel(L, B, N, D, H, MP, C):
    inv_count = 1.0 / float(B * N)

    def kernel(*refs):
        # inputs
        x_ref, adj_ref, beta_ref, lin_w_ref = refs[:4]
        rest = refs[4:]
        w_refs = [rest[2 * l] for l in range(L)]
        b_refs = [rest[2 * l + 1] for l in range(L)]
        rest = rest[2 * L:]
        gamma_ref, bnb_ref, w_out_ref, b_out_ref, out_ref = rest[:5]
        # scratch
        scratch = rest[5:]
        fadj_refs = list(scratch[:L - 1])     # final_adj for layers 1..L-1
        y_ref = scratch[L - 1]                # pre-BN activations of current layer
        sums_ref = scratch[L]                 # per-layer BN sum      (L, H)
        sqs_ref = scratch[L + 1]              # per-layer BN sum-sq   (L, H)

        s = pl.program_id(0)   # stage: 0..L-1 = layers, L = readout
        b = pl.program_id(1)   # graph / batch element

        # Zero the BN statistics accumulators once, at the very first grid step.
        @pl.when(jnp.logical_and(s == 0, b == 0))
        def _init_stats():
            sums_ref[...] = jnp.zeros_like(sums_ref)
            sqs_ref[...] = jnp.zeros_like(sqs_ref)

        def bn_relu(y, k):
            """Finalize layer-k BatchNorm (training stats, biased var) + ReLU."""
            mean = sums_ref[pl.ds(k, 1), :] * inv_count                # (1, H)
            var = sqs_ref[pl.ds(k, 1), :] * inv_count - mean * mean    # (1, H)
            g = gamma_ref[pl.ds(k, 1), :]
            be = bnb_ref[pl.ds(k, 1), :]
            return jnp.maximum((y - mean) * jax.lax.rsqrt(var + EPS) * g + be, 0.0)

        def accumulate_stats(y, k):
            sums_ref[pl.ds(k, 1), :] = (sums_ref[pl.ds(k, 1), :]
                                        + jnp.sum(y, axis=0, keepdims=True))
            sqs_ref[pl.ds(k, 1), :] = (sqs_ref[pl.ds(k, 1), :]
                                       + jnp.sum(y * y, axis=0, keepdims=True))

        # ------------------------------------------------------------------
        # Stage 0: single pass over this batch's beta tile.  Build final_adj
        # for all layers (beta is never re-read), run layer 0, accumulate
        # layer-0 BN statistics.
        # ------------------------------------------------------------------
        @pl.when(s == 0)
        def _stage0():
            x0 = x_ref[0, :, :]                                   # (N, D)  f32
            adj0 = adj_ref[0, :, :]                               # (N, N)  f32
            beta_f = beta_ref[0, :, :, :].astype(jnp.float32)     # (N, N, MP)

            def final_adj(l):
                bp = lin_w_ref[pl.ds(l, 1), pl.ds(0, MP)]         # (1, MP)
                a_sc = lin_w_ref[pl.ds(l, 1), pl.ds(MP, 1)]       # (1, 1)
                return jnp.sum(beta_f * bp, axis=-1) + adj0 * a_sc  # (N, N)

            # stash later layers' final_adj so beta is read from HBM only once
            for l in range(1, L):
                fadj_refs[l - 1][pl.ds(b, 1), :, :] = final_adj(l)[None]

            h0 = jnp.dot(x0, w_refs[0][...],
                         preferred_element_type=jnp.float32) + b_refs[0][...]
            y0 = jnp.dot(final_adj(0), h0, preferred_element_type=jnp.float32)

            accumulate_stats(y0, 0)
            y_ref[pl.ds(b, 1), :, :] = y0[None]

        # ------------------------------------------------------------------
        # Stages 1 .. L-1: finalize previous layer's BN + ReLU, run layer k.
        # ------------------------------------------------------------------
        for k in range(1, L):
            @pl.when(s == k)
            def _stage_k(k=k):
                y_prev = y_ref[pl.ds(b, 1), :, :][0]              # (N, H) pre-BN
                hk = bn_relu(y_prev, k - 1)
                hk = jnp.dot(hk, w_refs[k][...],
                             preferred_element_type=jnp.float32) + b_refs[k][...]
                fa = fadj_refs[k - 1][pl.ds(b, 1), :, :][0]       # (N, N)
                yk = jnp.dot(fa, hk, preferred_element_type=jnp.float32)
                accumulate_stats(yk, k)
                y_ref[pl.ds(b, 1), :, :] = yk[None]

        # ------------------------------------------------------------------
        # Stage L (fused readout): finalize last BN + ReLU, mean over nodes,
        # output linear, write one row of the resident output block.
        # ------------------------------------------------------------------
        @pl.when(s == L)
        def _readout():
            y_prev = y_ref[pl.ds(b, 1), :, :][0]
            hL = bn_relu(y_prev, L - 1)
            m = jnp.mean(hL, axis=0, keepdims=True)               # (1, H)
            out_ref[pl.ds(b, 1), :] = (
                jnp.dot(m, w_out_ref[...], preferred_element_type=jnp.float32)
                + b_out_ref[...])

    return kernel


# ---------------------------------------------------------------------------
# Wrapper: one pallas_call for the whole forward pass.
# ---------------------------------------------------------------------------
def t_hop_forward(params, x, adj, beta):
    """x: (B, N, D), adj: (B, N, N), beta: (B, N, N, N, pow_dim)."""
    B, N, D = x.shape
    MP = beta.shape[3] * beta.shape[4]
    L = len(params['W'])
    H = params['W'][0].shape[1]
    C = params['W_out'].shape[1]

    # glue from forward(): flatten beta's last two axes; stream it in bf16
    # (dominant HBM operand). All arithmetic stays in f32 inside the kernel.
    beta_flat = beta.reshape(B, N, N, MP).astype(jnp.bfloat16)

    # [beta_params | adj_param] per layer, contracted together in-kernel.
    beta_p = jnp.concatenate(params['beta_params'], axis=0)            # (L, MP)
    adj_p = jnp.concatenate(params['adj_params'], axis=0)[:, None]     # (L, 1)
    lin_w = jnp.concatenate([beta_p, adj_p], axis=1).astype(jnp.float32)  # (L, MP+1)

    gamma = jnp.concatenate(params['gamma'], axis=0)                   # (L, H)
    bnb = jnp.concatenate(params['bn_beta'], axis=0)                   # (L, H)

    def gate(s):
        # 1 at stage 0 (fetch per-batch blocks), 0 afterwards (keep block 0).
        return 1 - jnp.minimum(s, 1)

    in_specs = [
        pl.BlockSpec((1, N, D), lambda s, b: (b * gate(s), 0, 0)),
        pl.BlockSpec((1, N, N), lambda s, b: (b * gate(s), 0, 0)),
        pl.BlockSpec((1, N, N, MP), lambda s, b: (b * gate(s), 0, 0, 0)),
        pl.BlockSpec((L, MP + 1), lambda s, b: (0, 0)),
    ]
    inputs = [x, adj, beta_flat, lin_w]
    for l in range(L):
        W = params['W'][l]
        bb = params['b'][l]
        in_specs += [pl.BlockSpec(W.shape, lambda s, b: (0, 0)),
                     pl.BlockSpec(bb.shape, lambda s, b: (0, 0))]
        inputs += [W, bb]
    in_specs += [pl.BlockSpec((L, H), lambda s, b: (0, 0)),
                 pl.BlockSpec((L, H), lambda s, b: (0, 0)),
                 pl.BlockSpec(params['W_out'].shape, lambda s, b: (0, 0)),
                 pl.BlockSpec(params['b_out'].shape, lambda s, b: (0, 0))]
    inputs += [gamma, bnb, params['W_out'], params['b_out']]

    scratch = [pltpu.VMEM((B, N, N), jnp.float32) for _ in range(L - 1)]  # final_adj l>=1
    scratch += [pltpu.VMEM((B, N, H), jnp.float32),    # pre-BN activations
                pltpu.VMEM((L, H), jnp.float32),       # BN sums
                pltpu.VMEM((L, H), jnp.float32)]       # BN sum-of-squares

    return pl.pallas_call(
        _make_fused_kernel(L, B, N, D, H, MP, C),
        out_shape=jax.ShapeDtypeStruct((B, C), jnp.float32),
        grid=(L + 1, B),
        in_specs=in_specs,
        out_specs=pl.BlockSpec((B, C), lambda s, b: (0, 0)),
        scratch_shapes=scratch,
        compiler_params=pltpu.CompilerParams(
            # BatchNorm statistics couple all batches and stages are strictly
            # sequential, so both grid axes must stay "arbitrary".
            dimension_semantics=("arbitrary", "arbitrary"),
            vmem_limit_bytes=32 * 1024 * 1024,
        ),
    )(*inputs)


# ---------------------------------------------------------------------------
# Deterministic parameter init (synthetic; the 'normal' scheme of the module:
# mu = std = 1/(max_nodes*pow_dim + 1)).
# TODO(synk): const_param_init / he_param_init and WeightDrop are not defined
#             in the provided source; 'normal' init is used and w_drop=0 makes
#             WeightDrop an identity.
# ---------------------------------------------------------------------------
def init_params(key, max_nodes, pow_dim, num_layers, inp_dim, hid_dim, num_classes):
    MP = max_nodes * pow_dim
    mu = 1.0 / (MP + 1)
    keys = jax.random.split(key, 3 + 2 * num_layers)

    adj_all = (mu + mu * jax.random.normal(keys[0], (num_layers,))).astype(jnp.float32)
    beta_all = (mu + mu * jax.random.normal(keys[1], (num_layers, MP))).astype(jnp.float32)

    W, b, gamma, bn_beta, adj_params, beta_params = [], [], [], [], [], []
    for i in range(num_layers):
        fan_in = inp_dim if i == 0 else hid_dim
        bound = 1.0 / np.sqrt(fan_in)
        kw, kb = jax.random.split(keys[2 + i])
        W.append(jax.random.uniform(kw, (fan_in, hid_dim), jnp.float32, -bound, bound))
        b.append(jax.random.uniform(kb, (1, hid_dim), jnp.float32, -bound, bound))
        gamma.append(jnp.ones((1, hid_dim), jnp.float32))
        bn_beta.append(jnp.zeros((1, hid_dim), jnp.float32))
        adj_params.append(adj_all[i:i + 1])           # (1,)
        beta_params.append(beta_all[i:i + 1])         # (1, MP)

    bound = 1.0 / np.sqrt(hid_dim)
    kw, kb = jax.random.split(keys[2 + num_layers])
    W_out = jax.random.uniform(kw, (hid_dim, num_classes), jnp.float32, -bound, bound)
    b_out = jax.random.uniform(kb, (1, num_classes), jnp.float32, -bound, bound)

    return dict(W=W, b=b, gamma=gamma, bn_beta=bn_beta,
                adj_params=adj_params, beta_params=beta_params,
                W_out=W_out, b_out=b_out)


# ---------------------------------------------------------------------------
# Pure-JAX reference (mirrors the PyTorch forward; beta rounded to bf16 because
# the kernel streams it in bf16).  BN uses training-mode biased batch stats,
# applied since batch_size > 1, exactly as in the module.
# ---------------------------------------------------------------------------
def reference_forward(params, x, adj, beta):
    B, N = beta.shape[0], beta.shape[1]
    beta_flat = beta.reshape(B, N, N, -1).astype(jnp.bfloat16).astype(jnp.float32)
    h = x
    for i in range(len(params['W'])):
        pb = jnp.sum(beta_flat * params['beta_params'][i][0], axis=-1)
        fa = pb + adj * params['adj_params'][i][0]
        z = h @ params['W'][i] + params['b'][i][0]
        z = jnp.einsum('bnm,bmh->bnh', fa, z)
        mean = z.mean(axis=(0, 1), keepdims=True)
        var = jnp.square(z - mean).mean(axis=(0, 1), keepdims=True)
        z = (z - mean) / jnp.sqrt(var + EPS) * params['gamma'][i][0] + params['bn_beta'][i][0]
        h = jnp.maximum(z, 0.0)
    m = h.mean(axis=1)
    return m @ params['W_out'] + params['b_out'][0]


# ---------------------------------------------------------------------------
if __name__ == "__main__":
    B, max_nodes, pow_dim = 2, 16, 4
    inp_dim, hid_dim, num_classes, num_layers = 16, 32, 8, 2

    key = jax.random.PRNGKey(0)
    kx, ka, kb, kp = jax.random.split(key, 4)
    x = jax.random.normal(kx, (B, max_nodes, inp_dim), jnp.float32)
    adj = (jax.random.uniform(ka, (B, max_nodes, max_nodes)) < 0.3).astype(jnp.float32)
    beta = jax.random.normal(kb, (B, max_nodes, max_nodes, max_nodes, pow_dim), jnp.float32)

    params = init_params(kp, max_nodes, pow_dim, num_layers,
                         inp_dim, hid_dim, num_classes)

    out = jax.jit(t_hop_forward)(params, x, adj, beta)
    out = jax.block_until_ready(out)

    ref = reference_forward(params, x, adj, beta)
    # Tolerance covers the streaming (sum / sum-sq) BN statistics and MXU
    # accumulation-order differences; all math is f32 except the bf16 beta
    # stream, which the reference also sees.
    np.testing.assert_allclose(np.asarray(out), np.asarray(ref), rtol=1e-3, atol=1e-3)

    print("KERNEL_OK")
</pallas_src>

<mosaic_0001>
module attributes {stable_mosaic.version = 11 : i64} {
  func.func @kernel(%arg0: i32, %arg1: i32, %arg2: memref<1x16x16xf32, #tpu.memory_space<vmem>>, %arg3: memref<1x16x16xf32, #tpu.memory_space<vmem>>, %arg4: memref<1x16x16x64xbf16, #tpu.memory_space<vmem>>, %arg5: memref<2x65xf32, #tpu.memory_space<vmem>>, %arg6: memref<16x32xf32, #tpu.memory_space<vmem>>, %arg7: memref<1x32xf32, #tpu.memory_space<vmem>>, %arg8: memref<32x32xf32, #tpu.memory_space<vmem>>, %arg9: memref<1x32xf32, #tpu.memory_space<vmem>>, %arg10: memref<2x32xf32, #tpu.memory_space<vmem>>, %arg11: memref<2x32xf32, #tpu.memory_space<vmem>>, %arg12: memref<32x8xf32, #tpu.memory_space<vmem>>, %arg13: memref<1x8xf32, #tpu.memory_space<vmem>>, %arg14: memref<2x8xf32, #tpu.memory_space<vmem>>, %arg15: memref<2x16x16xf32, #tpu.memory_space<vmem>>, %arg16: memref<2x16x32xf32, #tpu.memory_space<vmem>>, %arg17: memref<2x32xf32, #tpu.memory_space<vmem>>, %arg18: memref<2x32xf32, #tpu.memory_space<vmem>>) attributes {dimension_semantics = [#tpu.dimension_semantics<arbitrary>, #tpu.dimension_semantics<arbitrary>], iteration_bounds = array<i64: 3, 2>, scalar_prefetch = 0 : i64, scratch_operands = 4 : i64, tpu.core_type = #tpu.core_type<tc>, window_params = [{transform_indices = @transform_0, window_bounds = array<i64: 1, 16, 16>}, {transform_indices = @transform_1, window_bounds = array<i64: 1, 16, 16>}, {transform_indices = @transform_2, window_bounds = array<i64: 1, 16, 16, 64>}, {pipeline_mode = #tpu.pipeline_mode<synchronous>, transform_indices = @transform_3, window_bounds = array<i64: 2, 65>}, {pipeline_mode = #tpu.pipeline_mode<synchronous>, transform_indices = @transform_4, window_bounds = array<i64: 16, 32>}, {pipeline_mode = #tpu.pipeline_mode<synchronous>, transform_indices = @transform_5, window_bounds = array<i64: 1, 32>}, {pipeline_mode = #tpu.pipeline_mode<synchronous>, transform_indices = @transform_6, window_bounds = array<i64: 32, 32>}, {pipeline_mode = #tpu.pipeline_mode<synchronous>, transform_indices = @transform_7, window_bounds = array<i64: 1, 32>}, {pipeline_mode = #tpu.pipeline_mode<synchronous>, transform_indices = @transform_8, window_bounds = array<i64: 2, 32>}, {pipeline_mode = #tpu.pipeline_mode<synchronous>, transform_indices = @transform_9, window_bounds = array<i64: 2, 32>}, {pipeline_mode = #tpu.pipeline_mode<synchronous>, transform_indices = @transform_10, window_bounds = array<i64: 32, 8>}, {pipeline_mode = #tpu.pipeline_mode<synchronous>, transform_indices = @transform_11, window_bounds = array<i64: 1, 8>}, {pipeline_mode = #tpu.pipeline_mode<synchronous>, transform_indices = @transform_12, window_bounds = array<i64: 2, 8>}]} {
    %c0_i32 = arith.constant 0 : i32
    %0 = arith.cmpi eq, %arg0, %c0_i32 : i32
    %c0_i32_0 = arith.constant 0 : i32
    %1 = arith.cmpi eq, %arg1, %c0_i32_0 : i32
    %2 = arith.andi %0, %1 : i1
    %3 = arith.extui %2 : i1 to i32
    %c0_i32_1 = arith.constant 0 : i32
    %4 = arith.cmpi ne, %3, %c0_i32_1 : i32
    scf.if %4 {
      %cst = arith.constant 0.000000e+00 : f32
      %14 = vector.broadcast %cst : f32 to vector<2x32xf32>
      %c0 = arith.constant 0 : index
      %c0_6 = arith.constant 0 : index
      %15 = vector.load %arg17[%c0, %c0_6] : memref<2x32xf32, #tpu.memory_space<vmem>>, vector<2x32xf32>
      tpu.vector_store %arg17[%c0, %c0_6], %14 {strides = array<i32>} : memref<2x32xf32, #tpu.memory_space<vmem>>, vector<2x32xf32>,
      %cst_7 = arith.constant 0.000000e+00 : f32
      %16 = vector.broadcast %cst_7 : f32 to vector<2x32xf32>
      %c0_8 = arith.constant 0 : index
      %c0_9 = arith.constant 0 : index
      %17 = vector.load %arg18[%c0_8, %c0_9] : memref<2x32xf32, #tpu.memory_space<vmem>>, vector<2x32xf32>
      tpu.vector_store %arg18[%c0_8, %c0_9], %16 {strides = array<i32>} : memref<2x32xf32, #tpu.memory_space<vmem>>, vector<2x32xf32>,
    } else {
    }
    %c0_i32_2 = arith.constant 0 : i32
    %5 = arith.cmpi eq, %arg0, %c0_i32_2 : i32
    %6 = arith.extui %5 : i1 to i32
    %c0_i32_3 = arith.constant 0 : i32
    %7 = arith.cmpi ne, %6, %c0_i32_3 : i32
    scf.if %7 {
      %c0 = arith.constant 0 : index
      %c0_6 = arith.constant 0 : index
      %c0_7 = arith.constant 0 : index
      %14 = vector.load %arg2[%c0, %c0_6, %c0_7] : memref<1x16x16xf32, #tpu.memory_space<vmem>>, vector<1x16x16xf32>
      %15 = vector.shape_cast %14 : vector<1x16x16xf32> to vector<16x16xf32>
      %c0_8 = arith.constant 0 : index
      %c0_9 = arith.constant 0 : index
      %c0_10 = arith.constant 0 : index
      %16 = vector.load %arg3[%c0_8, %c0_9, %c0_10] : memref<1x16x16xf32, #tpu.memory_space<vmem>>, vector<1x16x16xf32>
      %17 = vector.shape_cast %16 : vector<1x16x16xf32> to vector<16x16xf32>
      %c0_11 = arith.constant 0 : index
      %c0_12 = arith.constant 0 : index
      %c0_13 = arith.constant 0 : index
      %c0_14 = arith.constant 0 : index
      %18 = vector.load %arg4[%c0_11, %c0_12, %c0_13, %c0_14] : memref<1x16x16x64xbf16, #tpu.memory_space<vmem>>, vector<1x16x16x64xbf16>
      %19 = vector.shape_cast %18 : vector<1x16x16x64xbf16> to vector<16x16x64xbf16>
      %20 = arith.extf %19 : vector<16x16x64xbf16> to vector<16x16x64xf32>
      %c1 = arith.constant 1 : index
      %c0_15 = arith.constant 0 : index
      %21 = vector.load %arg5[%c1, %c0_15] : memref<2x65xf32, #tpu.memory_space<vmem>>, vector<1x64xf32>
      %c1_16 = arith.constant 1 : index
      %c64 = arith.constant 64 : index
      %22 = vector.load %arg5[%c1_16, %c64] : memref<2x65xf32, #tpu.memory_space<vmem>>, vector<1x1xf32>
      %23 = vector.shape_cast %21 : vector<1x64xf32> to vector<1x1x64xf32>
      %24 = vector.broadcast %23 : vector<1x1x64xf32> to vector<16x16x64xf32>
      %25 = arith.mulf %20, %24 : vector<16x16x64xf32>
      %cst = arith.constant dense<0.000000e+00> : vector<16x16xf32>
      %26 = vector.multi_reduction <add>, %25, %cst [2] : vector<16x16x64xf32> to vector<16x16xf32>
      %27 = vector.broadcast %22 : vector<1x1xf32> to vector<16x16xf32>
      %28 = arith.mulf %17, %27 : vector<16x16xf32>
      %29 = arith.addf %26, %28 : vector<16x16xf32>
      %30 = vector.shape_cast %29 : vector<16x16xf32> to vector<1x16x16xf32>
      %31 = arith.index_cast %arg1 : i32 to index
      %c0_17 = arith.constant 0 : index
      %c0_18 = arith.constant 0 : index
      %32 = vector.load %arg15[%31, %c0_17, %c0_18] : memref<2x16x16xf32, #tpu.memory_space<vmem>>, vector<1x16x16xf32>
      tpu.vector_store %arg15[%31, %c0_17, %c0_18], %30 {strides = array<i32>} : memref<2x16x16xf32, #tpu.memory_space<vmem>>, vector<1x16x16xf32>,
      %c0_19 = arith.constant 0 : index
      %c0_20 = arith.constant 0 : index
      %33 = vector.load %arg6[%c0_19, %c0_20] : memref<16x32xf32, #tpu.memory_space<vmem>>, vector<16x32xf32>
      %cst_21 = arith.constant dense<0.000000e+00> : vector<16x32xf32>
      %34 = tpu.matmul %15, %33, %cst_21 {dimension_numbers = #tpu.dot_dimension_numbers<[1], [0], [0], [1], [0, 0, 1, 1], [], []>} : vector<16x16xf32>, vector<16x32xf32>, vector<16x32xf32> -> vector<16x32xf32>
      %c0_22 = arith.constant 0 : index
      %c0_23 = arith.constant 0 : index
      %35 = vector.load %arg7[%c0_22, %c0_23] : memref<1x32xf32, #tpu.memory_space<vmem>>, vector<1x32xf32>
      %36 = vector.broadcast %35 : vector<1x32xf32> to vector<16x32xf32>
      %37 = arith.addf %34, %36 : vector<16x32xf32>
      %c0_24 = arith.constant 0 : index
      %c0_25 = arith.constant 0 : index
      %38 = vector.load %arg5[%c0_24, %c0_25] : memref<2x65xf32, #tpu.memory_space<vmem>>, vector<1x64xf32>
      %c0_26 = arith.constant 0 : index
      %c64_27 = arith.constant 64 : index
      %39 = vector.load %arg5[%c0_26, %c64_27] : memref<2x65xf32, #tpu.memory_space<vmem>>, vector<1x1xf32>
      %40 = vector.shape_cast %38 : vector<1x64xf32> to vector<1x1x64xf32>
      %41 = vector.broadcast %40 : vector<1x1x64xf32> to vector<16x16x64xf32>
      %42 = arith.mulf %20, %41 : vector<16x16x64xf32>
      %cst_28 = arith.constant dense<0.000000e+00> : vector<16x16xf32>
      %43 = vector.multi_reduction <add>, %42, %cst_28 [2] : vector<16x16x64xf32> to vector<16x16xf32>
      %44 = vector.broadcast %39 : vector<1x1xf32> to vector<16x16xf32>
      %45 = arith.mulf %17, %44 : vector<16x16xf32>
      %46 = arith.addf %43, %45 : vector<16x16xf32>
      %cst_29 = arith.constant dense<0.000000e+00> : vector<16x32xf32>
      %47 = tpu.matmul %46, %37, %cst_29 {dimension_numbers = #tpu.dot_dimension_numbers<[1], [0], [0], [1], [0, 0, 1, 1], [], []>} : vector<16x16xf32>, vector<16x32xf32>, vector<16x32xf32> -> vector<16x32xf32>
      %c0_30 = arith.constant 0 : index
      %c0_31 = arith.constant 0 : index
      %48 = vector.load %arg17[%c0_30, %c0_31] : memref<2x32xf32, #tpu.memory_space<vmem>>, vector<1x32xf32>
      %cst_32 = arith.constant dense<0.000000e+00> : vector<32xf32>
      %49 = vector.multi_reduction <add>, %47, %cst_32 [0] : vector<16x32xf32> to vector<32xf32>
      %50 = vector.shape_cast %49 : vector<32xf32> to vector<1x32xf32>
      %51 = arith.addf %48, %50 : vector<1x32xf32>
      %c0_33 = arith.constant 0 : index
      %c0_34 = arith.constant 0 : index
      %52 = vector.load %arg17[%c0_33, %c0_34] : memref<2x32xf32, #tpu.memory_space<vmem>>, vector<1x32xf32>
      tpu.vector_store %arg17[%c0_33, %c0_34], %51 {strides = array<i32>} : memref<2x32xf32, #tpu.memory_space<vmem>>, vector<1x32xf32>,
      %c0_35 = arith.constant 0 : index
      %c0_36 = arith.constant 0 : index
      %53 = vector.load %arg18[%c0_35, %c0_36] : memref<2x32xf32, #tpu.memory_space<vmem>>, vector<1x32xf32>
      %54 = arith.mulf %47, %47 : vector<16x32xf32>
      %cst_37 = arith.constant dense<0.000000e+00> : vector<32xf32>
      %55 = vector.multi_reduction <add>, %54, %cst_37 [0] : vector<16x32xf32> to vector<32xf32>
      %56 = vector.shape_cast %55 : vector<32xf32> to vector<1x32xf32>
      %57 = arith.addf %53, %56 : vector<1x32xf32>
      %c0_38 = arith.constant 0 : index
      %c0_39 = arith.constant 0 : index
      %58 = vector.load %arg18[%c0_38, %c0_39] : memref<2x32xf32, #tpu.memory_space<vmem>>, vector<1x32xf32>
      tpu.vector_store %arg18[%c0_38, %c0_39], %57 {strides = array<i32>} : memref<2x32xf32, #tpu.memory_space<vmem>>, vector<1x32xf32>,
      %59 = vector.shape_cast %47 : vector<16x32xf32> to vector<1x16x32xf32>
      %60 = arith.index_cast %arg1 : i32 to index
      %c0_40 = arith.constant 0 : index
      %c0_41 = arith.constant 0 : index
      %61 = vector.load %arg16[%60, %c0_40, %c0_41] : memref<2x16x32xf32, #tpu.memory_space<vmem>>, vector<1x16x32xf32>
      tpu.vector_store %arg16[%60, %c0_40, %c0_41], %59 {strides = array<i32>} : memref<2x16x32xf32, #tpu.memory_space<vmem>>, vector<1x16x32xf32>,
    } else {
    }
    %c1_i32 = arith.constant 1 : i32
    %8 = arith.cmpi eq, %arg0, %c1_i32 : i32
    %9 = arith.extui %8 : i1 to i32
    %c0_i32_4 = arith.constant 0 : i32
    %10 = arith.cmpi ne, %9, %c0_i32_4 : i32
    scf.if %10 {
      %14 = arith.index_cast %arg1 : i32 to index
      %c0 = arith.constant 0 : index
      %c0_6 = arith.constant 0 : index
      %15 = vector.load %arg16[%14, %c0, %c0_6] : memref<2x16x32xf32, #tpu.memory_space<vmem>>, vector<1x16x32xf32>
      %16 = vector.shape_cast %15 : vector<1x16x32xf32> to vector<16x32xf32>
      %c0_7 = arith.constant 0 : index
      %c0_8 = arith.constant 0 : index
      %17 = vector.load %arg17[%c0_7, %c0_8] : memref<2x32xf32, #tpu.memory_space<vmem>>, vector<1x32xf32>
      %cst = arith.constant 3.125000e-02 : f32
      %18 = vector.broadcast %cst : f32 to vector<1x32xf32>
      %19 = arith.mulf %17, %18 : vector<1x32xf32>
      %c0_9 = arith.constant 0 : index
      %c0_10 = arith.constant 0 : index
      %20 = vector.load %arg18[%c0_9, %c0_10] : memref<2x32xf32, #tpu.memory_space<vmem>>, vector<1x32xf32>
      %cst_11 = arith.constant 3.125000e-02 : f32
      %21 = vector.broadcast %cst_11 : f32 to vector<1x32xf32>
      %22 = arith.mulf %20, %21 : vector<1x32xf32>
      %23 = arith.mulf %19, %19 : vector<1x32xf32>
      %24 = arith.subf %22, %23 : vector<1x32xf32>
      %c0_12 = arith.constant 0 : index
      %c0_13 = arith.constant 0 : index
      %25 = vector.load %arg10[%c0_12, %c0_13] : memref<2x32xf32, #tpu.memory_space<vmem>>, vector<1x32xf32>
      %c0_14 = arith.constant 0 : index
      %c0_15 = arith.constant 0 : index
      %26 = vector.load %arg11[%c0_14, %c0_15] : memref<2x32xf32, #tpu.memory_space<vmem>>, vector<1x32xf32>
      %27 = vector.broadcast %19 : vector<1x32xf32> to vector<16x32xf32>
      %28 = arith.subf %16, %27 : vector<16x32xf32>
      %cst_16 = arith.constant 9.99999974E-6 : f32
      %29 = vector.broadcast %cst_16 : f32 to vector<1x32xf32>
      %30 = arith.addf %24, %29 : vector<1x32xf32>
      %31 = math.rsqrt %30 : vector<1x32xf32>
      %32 = vector.broadcast %31 : vector<1x32xf32> to vector<16x32xf32>
      %33 = arith.mulf %28, %32 : vector<16x32xf32>
      %34 = vector.broadcast %25 : vector<1x32xf32> to vector<16x32xf32>
      %35 = arith.mulf %33, %34 : vector<16x32xf32>
      %36 = vector.broadcast %26 : vector<1x32xf32> to vector<16x32xf32>
      %37 = arith.addf %35, %36 : vector<16x32xf32>
      %cst_17 = arith.constant 0.000000e+00 : f32
      %38 = vector.broadcast %cst_17 : f32 to vector<16x32xf32>
      %39 = arith.maximumf %37, %38 : vector<16x32xf32>
      %c0_18 = arith.constant 0 : index
      %c0_19 = arith.constant 0 : index
      %40 = vector.load %arg8[%c0_18, %c0_19] : memref<32x32xf32, #tpu.memory_space<vmem>>, vector<32x32xf32>
      %cst_20 = arith.constant dense<0.000000e+00> : vector<16x32xf32>
      %41 = tpu.matmul %39, %40, %cst_20 {dimension_numbers = #tpu.dot_dimension_numbers<[1], [0], [0], [1], [0, 0, 1, 1], [], []>} : vector<16x32xf32>, vector<32x32xf32>, vector<16x32xf32> -> vector<16x32xf32>
      %c0_21 = arith.constant 0 : index
      %c0_22 = arith.constant 0 : index
      %42 = vector.load %arg9[%c0_21, %c0_22] : memref<1x32xf32, #tpu.memory_space<vmem>>, vector<1x32xf32>
      %43 = vector.broadcast %42 : vector<1x32xf32> to vector<16x32xf32>
      %44 = arith.addf %41, %43 : vector<16x32xf32>
      %45 = arith.index_cast %arg1 : i32 to index
      %c0_23 = arith.constant 0 : index
      %c0_24 = arith.constant 0 : index
      %46 = vector.load %arg15[%45, %c0_23, %c0_24] : memref<2x16x16xf32, #tpu.memory_space<vmem>>, vector<1x16x16xf32>
      %47 = vector.shape_cast %46 : vector<1x16x16xf32> to vector<16x16xf32>
      %cst_25 = arith.constant dense<0.000000e+00> : vector<16x32xf32>
      %48 = tpu.matmul %47, %44, %cst_25 {dimension_numbers = #tpu.dot_dimension_numbers<[1], [0], [0], [1], [0, 0, 1, 1], [], []>} : vector<16x16xf32>, vector<16x32xf32>, vector<16x32xf32> -> vector<16x32xf32>
      %c1 = arith.constant 1 : index
      %c0_26 = arith.constant 0 : index
      %49 = vector.load %arg17[%c1, %c0_26] : memref<2x32xf32, #tpu.memory_space<vmem>>, vector<1x32xf32>
      %cst_27 = arith.constant dense<0.000000e+00> : vector<32xf32>
      %50 = vector.multi_reduction <add>, %48, %cst_27 [0] : vector<16x32xf32> to vector<32xf32>
      %51 = vector.shape_cast %50 : vector<32xf32> to vector<1x32xf32>
      %52 = arith.addf %49, %51 : vector<1x32xf32>
      %c1_28 = arith.constant 1 : index
      %c0_29 = arith.constant 0 : index
      %53 = vector.load %arg17[%c1_28, %c0_29] : memref<2x32xf32, #tpu.memory_space<vmem>>, vector<1x32xf32>
      tpu.vector_store %arg17[%c1_28, %c0_29], %52 {strides = array<i32>} : memref<2x32xf32, #tpu.memory_space<vmem>>, vector<1x32xf32>,
      %c1_30 = arith.constant 1 : index
      %c0_31 = arith.constant 0 : index
      %54 = vector.load %arg18[%c1_30, %c0_31] : memref<2x32xf32, #tpu.memory_space<vmem>>, vector<1x32xf32>
      %55 = arith.mulf %48, %48 : vector<16x32xf32>
      %cst_32 = arith.constant dense<0.000000e+00> : vector<32xf32>
      %56 = vector.multi_reduction <add>, %55, %cst_32 [0] : vector<16x32xf32> to vector<32xf32>
      %57 = vector.shape_cast %56 : vector<32xf32> to vector<1x32xf32>
      %58 = arith.addf %54, %57 : vector<1x32xf32>
      %c1_33 = arith.constant 1 : index
      %c0_34 = arith.constant 0 : index
      %59 = vector.load %arg18[%c1_33, %c0_34] : memref<2x32xf32, #tpu.memory_space<vmem>>, vector<1x32xf32>
      tpu.vector_store %arg18[%c1_33, %c0_34], %58 {strides = array<i32>} : memref<2x32xf32, #tpu.memory_space<vmem>>, vector<1x32xf32>,
      %60 = vector.shape_cast %48 : vector<16x32xf32> to vector<1x16x32xf32>
      %61 = arith.index_cast %arg1 : i32 to index
      %c0_35 = arith.constant 0 : index
      %c0_36 = arith.constant 0 : index
      %62 = vector.load %arg16[%61, %c0_35, %c0_36] : memref<2x16x32xf32, #tpu.memory_space<vmem>>, vector<1x16x32xf32>
      tpu.vector_store %arg16[%61, %c0_35, %c0_36], %60 {strides = array<i32>} : memref<2x16x32xf32, #tpu.memory_space<vmem>>, vector<1x16x32xf32>,
    } else {
    }
    %c2_i32 = arith.constant 2 : i32
    %11 = arith.cmpi eq, %arg0, %c2_i32 : i32
    %12 = arith.extui %11 : i1 to i32
    %c0_i32_5 = arith.constant 0 : i32
    %13 = arith.cmpi ne, %12, %c0_i32_5 : i32
    scf.if %13 {
      %14 = arith.index_cast %arg1 : i32 to index
      %c0 = arith.constant 0 : index
      %c0_6 = arith.constant 0 : index
      %15 = vector.load %arg16[%14, %c0, %c0_6] : memref<2x16x32xf32, #tpu.memory_space<vmem>>, vector<1x16x32xf32>
      %16 = vector.shape_cast %15 : vector<1x16x32xf32> to vector<16x32xf32>
      %c1 = arith.constant 1 : index
      %c0_7 = arith.constant 0 : index
      %17 = vector.load %arg17[%c1, %c0_7] : memref<2x32xf32, #tpu.memory_space<vmem>>, vector<1x32xf32>
      %cst = arith.constant 3.125000e-02 : f32
      %18 = vector.broadcast %cst : f32 to vector<1x32xf32>
      %19 = arith.mulf %17, %18 : vector<1x32xf32>
      %c1_8 = arith.constant 1 : index
      %c0_9 = arith.constant 0 : index
      %20 = vector.load %arg18[%c1_8, %c0_9] : memref<2x32xf32, #tpu.memory_space<vmem>>, vector<1x32xf32>
      %cst_10 = arith.constant 3.125000e-02 : f32
      %21 = vector.broadcast %cst_10 : f32 to vector<1x32xf32>
      %22 = arith.mulf %20, %21 : vector<1x32xf32>
      %23 = arith.mulf %19, %19 : vector<1x32xf32>
      %24 = arith.subf %22, %23 : vector<1x32xf32>
      %c1_11 = arith.constant 1 : index
      %c0_12 = arith.constant 0 : index
      %25 = vector.load %arg10[%c1_11, %c0_12] : memref<2x32xf32, #tpu.memory_space<vmem>>, vector<1x32xf32>
      %c1_13 = arith.constant 1 : index
      %c0_14 = arith.constant 0 : index
      %26 = vector.load %arg11[%c1_13, %c0_14] : memref<2x32xf32, #tpu.memory_space<vmem>>, vector<1x32xf32>
      %27 = vector.broadcast %19 : vector<1x32xf32> to vector<16x32xf32>
      %28 = arith.subf %16, %27 : vector<16x32xf32>
      %cst_15 = arith.constant 9.99999974E-6 : f32
      %29 = vector.broadcast %cst_15 : f32 to vector<1x32xf32>
      %30 = arith.addf %24, %29 : vector<1x32xf32>
      %31 = math.rsqrt %30 : vector<1x32xf32>
      %32 = vector.broadcast %31 : vector<1x32xf32> to vector<16x32xf32>
      %33 = arith.mulf %28, %32 : vector<16x32xf32>
      %34 = vector.broadcast %25 : vector<1x32xf32> to vector<16x32xf32>
      %35 = arith.mulf %33, %34 : vector<16x32xf32>
      %36 = vector.broadcast %26 : vector<1x32xf32> to vector<16x32xf32>
      %37 = arith.addf %35, %36 : vector<16x32xf32>
      %cst_16 = arith.constant 0.000000e+00 : f32
      %38 = vector.broadcast %cst_16 : f32 to vector<16x32xf32>
      %39 = arith.maximumf %37, %38 : vector<16x32xf32>
      %cst_17 = arith.constant dense<0.000000e+00> : vector<32xf32>
      %40 = vector.multi_reduction <add>, %39, %cst_17 [0] : vector<16x32xf32> to vector<32xf32>
      %41 = vector.shape_cast %40 : vector<32xf32> to vector<1x32xf32>
      %cst_18 = arith.constant 1.600000e+01 : f32
      %42 = vector.broadcast %cst_18 : f32 to vector<1x32xf32>
      %43 = arith.divf %41, %42 : vector<1x32xf32>
      %c0_19 = arith.constant 0 : index
      %c0_20 = arith.constant 0 : index
      %44 = vector.load %arg12[%c0_19, %c0_20] : memref<32x8xf32, #tpu.memory_space<vmem>>, vector<32x8xf32>
      %cst_21 = arith.constant dense<0.000000e+00> : vector<1x8xf32>
      %45 = tpu.matmul %43, %44, %cst_21 {dimension_numbers = #tpu.dot_dimension_numbers<[1], [0], [0], [1], [0, 0, 1, 1], [], []>} : vector<1x32xf32>, vector<32x8xf32>, vector<1x8xf32> -> vector<1x8xf32>
      %c0_22 = arith.constant 0 : index
      %c0_23 = arith.constant 0 : index
      %46 = vector.load %arg13[%c0_22, %c0_23] : memref<1x8xf32, #tpu.memory_space<vmem>>, vector<1x8xf32>
      %47 = arith.addf %45, %46 : vector<1x8xf32>
      %48 = arith.index_cast %arg1 : i32 to index
      %c0_24 = arith.constant 0 : index
      %49 = vector.load %arg14[%48, %c0_24] : memref<2x8xf32, #tpu.memory_space<vmem>>, vector<1x8xf32>
      tpu.vector_store %arg14[%48, %c0_24], %47 {strides = array<i32>} : memref<2x8xf32, #tpu.memory_space<vmem>>, vector<1x8xf32>,
    } else {
    }
    return
  }
  func.func @transform_0(%arg0: i32, %arg1: i32) -> (i32, i32, i32) {
    %c1_i32 = arith.constant 1 : i32
    %0 = arith.minsi %arg0, %c1_i32 : i32
    %c1_i32_0 = arith.constant 1 : i32
    %1 = arith.subi %c1_i32_0, %0 : i32
    %2 = arith.muli %arg1, %1 : i32
    %c0_i32 = arith.constant 0 : i32
    %c0_i32_1 = arith.constant 0 : i32
    %c0_i32_2 = arith.constant 0 : i32
    return %2, %c0_i32, %c0_i32_1 : i32, i32, i32
  }
  func.func @transform_1(%arg0: i32, %arg1: i32) -> (i32, i32, i32) {
    %c1_i32 = arith.constant 1 : i32
    %0 = arith.minsi %arg0, %c1_i32 : i32
    %c1_i32_0 = arith.constant 1 : i32
    %1 = arith.subi %c1_i32_0, %0 : i32
    %2 = arith.muli %arg1, %1 : i32
    %c0_i32 = arith.constant 0 : i32
    %c0_i32_1 = arith.constant 0 : i32
    %c0_i32_2 = arith.constant 0 : i32
    return %2, %c0_i32, %c0_i32_1 : i32, i32, i32
  }
  func.func @transform_2(%arg0: i32, %arg1: i32) -> (i32, i32, i32, i32) {
    %c1_i32 = arith.constant 1 : i32
    %0 = arith.minsi %arg0, %c1_i32 : i32
    %c1_i32_0 = arith.constant 1 : i32
    %1 = arith.subi %c1_i32_0, %0 : i32
    %2 = arith.muli %arg1, %1 : i32
    %c0_i32 = arith.constant 0 : i32
    %c0_i32_1 = arith.constant 0 : i32
    %c0_i32_2 = arith.constant 0 : i32
    %c0_i32_3 = arith.constant 0 : i32
    return %2, %c0_i32, %c0_i32_1, %c0_i32_2 : i32, i32, i32, i32
  }
  func.func @transform_3(%arg0: i32, %arg1: i32) -> (i32, i32) {
    %c0_i32 = arith.constant 0 : i32
    %c0_i32_0 = arith.constant 0 : i32
    %c0_i32_1 = arith.constant 0 : i32
    return %c0_i32, %c0_i32_0 : i32, i32
  }
  func.func @transform_4(%arg0: i32, %arg1: i32) -> (i32, i32) {
    %c0_i32 = arith.constant 0 : i32
    %c0_i32_0 = arith.constant 0 : i32
    %c0_i32_1 = arith.constant 0 : i32
    return %c0_i32, %c0_i32_0 : i32, i32
  }
  func.func @transform_5(%arg0: i32, %arg1: i32) -> (i32, i32) {
    %c0_i32 = arith.constant 0 : i32
    %c0_i32_0 = arith.constant 0 : i32
    %c0_i32_1 = arith.constant 0 : i32
    return %c0_i32, %c0_i32_0 : i32, i32
  }
  func.func @transform_6(%arg0: i32, %arg1: i32) -> (i32, i32) {
    %c0_i32 = arith.constant 0 : i32
    %c0_i32_0 = arith.constant 0 : i32
    %c0_i32_1 = arith.constant 0 : i32
    return %c0_i32, %c0_i32_0 : i32, i32
  }
  func.func @transform_7(%arg0: i32, %arg1: i32) -> (i32, i32) {
    %c0_i32 = arith.constant 0 : i32
    %c0_i32_0 = arith.constant 0 : i32
    %c0_i32_1 = arith.constant 0 : i32
    return %c0_i32, %c0_i32_0 : i32, i32
  }
  func.func @transform_8(%arg0: i32, %arg1: i32) -> (i32, i32) {
    %c0_i32 = arith.constant 0 : i32
    %c0_i32_0 = arith.constant 0 : i32
    %c0_i32_1 = arith.constant 0 : i32
    return %c0_i32, %c0_i32_0 : i32, i32
  }
  func.func @transform_9(%arg0: i32, %arg1: i32) -> (i32, i32) {
    %c0_i32 = arith.constant 0 : i32
    %c0_i32_0 = arith.constant 0 : i32
    %c0_i32_1 = arith.constant 0 : i32
    return %c0_i32, %c0_i32_0 : i32, i32
  }
  func.func @transform_10(%arg0: i32, %arg1: i32) -> (i32, i32) {
    %c0_i32 = arith.constant 0 : i32
    %c0_i32_0 = arith.constant 0 : i32
    %c0_i32_1 = arith.constant 0 : i32
    return %c0_i32, %c0_i32_0 : i32, i32
  }
  func.func @transform_11(%arg0: i32, %arg1: i32) -> (i32, i32) {
    %c0_i32 = arith.constant 0 : i32
    %c0_i32_0 = arith.constant 0 : i32
    %c0_i32_1 = arith.constant 0 : i32
    return %c0_i32, %c0_i32_0 : i32, i32
  }
  func.func @transform_12(%arg0: i32, %arg1: i32) -> (i32, i32) {
    %c0_i32 = arith.constant 0 : i32
    %c0_i32_0 = arith.constant 0 : i32
    %c0_i32_1 = arith.constant 0 : i32
    return %c0_i32, %c0_i32_0 : i32, i32
  }
}

</mosaic_0001>

<llo_original>
// kernel: t_hop_forward.1
$region0: #{t_hop_forward.1}
  #allocation0 [shape = 'u32[]', space=smem, size = 0x4, offset = 0x4, fixed_abs, tag = 'smem constant byte address 0x4 - core index']
  #allocation1 [shape = 'u32[144,128]{1,0:T(1,128)}', space=vmem, size = 0x12000, scoped, tag = 'internal scratch']
  #allocation2 [shape = 'f32[2,16,16]{2,1,0:T(8,128)}', space=vmem, size = 0x4000, scoped, tag = 'scratch operand']
  #allocation3 [shape = 'f32[2,16,32]{2,1,0:T(8,128)}', space=vmem, size = 0x4000, scoped, tag = 'scratch operand']
  #allocation4 [shape = 'f32[2,32]{1,0:T(2,128)}', space=vmem, size = 0x400, scoped, tag = 'scratch operand']
  #allocation5 [shape = 'f32[2,32]{1,0:T(2,128)}', space=vmem, size = 0x400, scoped, tag = 'scratch operand']
  %s0 = inlined_call_operand.vmem [shape: f32[2,16,16], index: 0, kind: input, shape index: {}]
  %s1 = inlined_call_operand.vmem [shape: f32[2,16,16], index: 1, kind: input, shape index: {}]
  %s2 = inlined_call_operand.vmem [shape: bf16[2,16,16,64], index: 2, kind: input, shape index: {}]
  %s3 = inlined_call_operand.vmem [shape: f32[2,65], index: 3, kind: input, shape index: {}]
  %s4 = inlined_call_operand.vmem [shape: f32[16,32], index: 4, kind: input, shape index: {}]
  %s5 = inlined_call_operand.vmem [shape: f32[1,32], index: 5, kind: input, shape index: {}]
  %s6 = inlined_call_operand.vmem [shape: f32[32,32], index: 6, kind: input, shape index: {}]
  %s7 = inlined_call_operand.vmem [shape: f32[1,32], index: 7, kind: input, shape index: {}]
  %s8 = inlined_call_operand.vmem [shape: f32[2,32], index: 8, kind: input, shape index: {}]
  %s9 = inlined_call_operand.vmem [shape: f32[2,32], index: 9, kind: input, shape index: {}]
  %s10 = inlined_call_operand.vmem [shape: f32[32,8], index: 10, kind: input, shape index: {}]
  %s11 = inlined_call_operand.vmem [shape: f32[1,8], index: 11, kind: input, shape index: {}]
  %s12 = inlined_call_operand.hbm [shape: f32[2,8], index: 12, kind: output, shape index: {}]
  %s13 = sld [smem:[#allocation0]]
  $region97: #{t_hop_forward.1} parent=0
    _
  %s15 = ssub.s32 1, %s13
  %s16 = scalar_select 0, %s15, %s13
  $region1: #{t_hop_forward.1} parent=0
    #allocation6 [shape = 'u8[1024]{0}', space=vmem, size = 0x400, scoped, tag = 'output window, operand 0, single buffered']
    #allocation7 [shape = 's32[2]{0}', space=sflag, size = 0x8, scoped, tag = 'scoped memory for t_hop_forward.1']
    %17 = vsyncpa [#allocation7], 0
    loop: start=0, step=1, limit=8
    $region2: #{t_hop_forward.1} parent=1 // loop_pre_header
      _
    $region3: #{t_hop_forward.1} parent=1 // loop_header
      %s19 = sphi 0, %s23
      %p20 = scmp.ge.s32.totalorder %s19, 8
      %s26 = sphi 0, %s38
      %s27 = sphi 0, %s34
      %s28 = sphi 0, %s26
      %s29 = sphi 0, %s27
      %s30 = sphi 0, %s28
      %s31 = sphi 0, %s29
      %s49 = sphi 0, %s51
      %s52 = sphi 0, %s49
      %s53 = sphi 0, %s52
      %s69 = sphi 0, %s53
      %s83 = sphi 0, %s85
      %s86 = sphi 0, %s83
      %s87 = sphi 0, %s86
      %s103 = sphi 0, %s87
      %s117 = sphi 0, %s119
      %s120 = sphi 0, %s117
      %s121 = sphi 0, %s120
      %s137 = sphi 0, %s121
      %s141 = sphi 0, %s141
      %s143 = sphi 0, %s141
      %s144 = sphi 0, %s143
      %s158 = sphi 0, %s144
      %s162 = sphi 0, %s162
      %s164 = sphi 0, %s162
      %s165 = sphi 0, %s164
      %s179 = sphi 0, %s165
      %s183 = sphi 0, %s183
      %s185 = sphi 0, %s183
      %s186 = sphi 0, %s185
      %s200 = sphi 0, %s186
      %s204 = sphi 0, %s204
      %s206 = sphi 0, %s204
      %s207 = sphi 0, %s206
      %s221 = sphi 0, %s207
      %s225 = sphi 0, %s225
      %s227 = sphi 0, %s225
      %s228 = sphi 0, %s227
      %s242 = sphi 0, %s228
      %s246 = sphi 0, %s246
      %s248 = sphi 0, %s246
      %s249 = sphi 0, %s248
      %s263 = sphi 0, %s249
      %s267 = sphi 0, %s267
      %s269 = sphi 0, %s267
      %s270 = sphi 0, %s269
      %s284 = sphi 0, %s270
      %s288 = sphi 0, %s288
      %s290 = sphi 0, %s288
      %s291 = sphi 0, %s290
      %s305 = sphi 0, %s291
      %s309 = sphi 0, %s309
      %s311 = sphi 0, %s309
      %s312 = sphi 0, %s311
      %s326 = sphi 0, %s312
      %s330 = sphi 0, %s330
      %s332 = sphi 0, %s330
      %s333 = sphi 0, %s332
      %s347 = sphi 0, %s333
    $region4: #{t_hop_forward.1} parent=1 // loop_header_branch
      %22 = sbr.rel (%p20) target = $region8
    $region5: #{t_hop_forward.1} parent=1 // loop_body
      %s24 = ssub.s32 %s19, 1
      %s25 = ssub.s32 %s19, 2
      %s32 = sadd.s32 1, %s27
      %p33 = scmp.ge.s32.totalorder %s32, 2
      %s34 = scalar_select %p33, 0, %s32
      %s35 = sadd.s32 1, %s26
      %s36 = scalar_select %p33, %s35, %s26
      %p37 = scmp.ge.s32.totalorder %s36, 3
      %s38 = scalar_select %p37, 0, %s36
      %p39 = scmp.lt.s32.totalorder %s26, 1
      %s40 = scalar_select %p39, %s26, 1
      %s41 = ssub.s32 1, %s40
      %s42 = smul.u32 %s27, %s41
      %p43 = scmp.lt.s32.totalorder %s38, 1
      %s44 = scalar_select %p43, %s38, 1
      %s45 = ssub.s32 1, %s44
      %s46 = smul.u32 %s34, %s45
      %s47 = ssub.s32 %s42, %s46
      %p48 = scmp.eq.s32.totalorder %s47, 0
      %s50 = sadd.s32 %s49, 1
      %s51 = scalar_select %p48, %s49, %s50
      %p54 = pneg %p48
      %p55 = scmp.eq.s32.totalorder %s19, 5
      %p56 = por %p54, %p55
      %p57 = scmp.ne.s32.totalorder %s49, %s52
      %p58 = scmp.eq.s32.totalorder %s19, 0
      %p59 = por %p57, %p58
      %p60 = scmp.ne.s32.totalorder %s49, %s52
      %p61 = scmp.eq.s32.totalorder %s24, 5
      %p62 = por %p60, %p61
      %p63 = scmp.ne.s32.totalorder %s52, %s53
      %p64 = scmp.eq.s32.totalorder %s24, 0
      %p65 = por %p63, %p64
      %p66 = scmp.ne.s32.totalorder %s52, %s53
      %p67 = scmp.eq.s32.totalorder %s25, 5
      %p68 = por %p66, %p67
      %p70 = scmp.ne.s32.totalorder %s53, %s69
      %p71 = scmp.eq.s32.totalorder %s25, 0
      %p72 = por %p70, %p71
      %p73 = scmp.lt.s32.totalorder %s26, 1
      %s74 = scalar_select %p73, %s26, 1
      %s75 = ssub.s32 1, %s74
      %s76 = smul.u32 %s27, %s75
      %p77 = scmp.lt.s32.totalorder %s38, 1
      %s78 = scalar_select %p77, %s38, 1
      %s79 = ssub.s32 1, %s78
      %s80 = smul.u32 %s34, %s79
      %s81 = ssub.s32 %s76, %s80
      %p82 = scmp.eq.s32.totalorder %s81, 0
      %s84 = sadd.s32 %s83, 1
      %s85 = scalar_select %p82, %s83, %s84
      %p88 = pneg %p82
      %p89 = scmp.eq.s32.totalorder %s19, 5
      %p90 = por %p88, %p89
      %p91 = scmp.ne.s32.totalorder %s83, %s86
      %p92 = scmp.eq.s32.totalorder %s19, 0
      %p93 = por %p91, %p92
      %p94 = scmp.ne.s32.totalorder %s83, %s86
      %p95 = scmp.eq.s32.totalorder %s24, 5
      %p96 = por %p94, %p95
      %p97 = scmp.ne.s32.totalorder %s86, %s87
      %p98 = scmp.eq.s32.totalorder %s24, 0
      %p99 = por %p97, %p98
      %p100 = scmp.ne.s32.totalorder %s86, %s87
      %p101 = scmp.eq.s32.totalorder %s25, 5
      %p102 = por %p100, %p101
      %p104 = scmp.ne.s32.totalorder %s87, %s103
      %p105 = scmp.eq.s32.totalorder %s25, 0
      %p106 = por %p104, %p105
      %p107 = scmp.lt.s32.totalorder %s26, 1
      %s108 = scalar_select %p107, %s26, 1
      %s109 = ssub.s32 1, %s108
      %s110 = smul.u32 %s27, %s109
      %p111 = scmp.lt.s32.totalorder %s38, 1
      %s112 = scalar_select %p111, %s38, 1
      %s113 = ssub.s32 1, %s112
      %s114 = smul.u32 %s34, %s113
      %s115 = ssub.s32 %s110, %s114
      %p116 = scmp.eq.s32.totalorder %s115, 0
      %s118 = sadd.s32 %s117, 1
      %s119 = scalar_select %p116, %s117, %s118
      %p122 = pneg %p116
      %p123 = scmp.eq.s32.totalorder %s19, 5
      %p124 = por %p122, %p123
      %p125 = scmp.ne.s32.totalorder %s117, %s120
      %p126 = scmp.eq.s32.totalorder %s19, 0
      %p127 = por %p125, %p126
      %p128 = scmp.ne.s32.totalorder %s117, %s120
      %p129 = scmp.eq.s32.totalorder %s24, 5
      %p130 = por %p128, %p129
      %p131 = scmp.ne.s32.totalorder %s120, %s121
      %p132 = scmp.eq.s32.totalorder %s24, 0
      %p133 = por %p131, %p132
      %p134 = scmp.ne.s32.totalorder %s120, %s121
      %p135 = scmp.eq.s32.totalorder %s25, 5
      %p136 = por %p134, %p135
      %p138 = scmp.ne.s32.totalorder %s121, %s137
      %p139 = scmp.eq.s32.totalorder %s25, 0
      %p140 = por %p138, %p139
      %s142 = sadd.s32 %s141, 1
      %p145 = scmp.eq.s32.totalorder %s19, 5
      %p146 = scmp.ne.s32.totalorder %s141, %s143
      %p147 = scmp.eq.s32.totalorder %s19, 0
      %p148 = por %p146, %p147
      %p149 = scmp.ne.s32.totalorder %s141, %s143
      %p150 = scmp.eq.s32.totalorder %s24, 5
      %p151 = por %p149, %p150
      %p152 = scmp.ne.s32.totalorder %s143, %s144
      %p153 = scmp.eq.s32.totalorder %s24, 0
      %p154 = por %p152, %p153
      %p155 = scmp.ne.s32.totalorder %s143, %s144
      %p156 = scmp.eq.s32.totalorder %s25, 5
      %p157 = por %p155, %p156
      %p159 = scmp.ne.s32.totalorder %s144, %s158
      %p160 = scmp.eq.s32.totalorder %s25, 0
      %p161 = por %p159, %p160
      %s163 = sadd.s32 %s162, 1
      %p166 = scmp.eq.s32.totalorder %s19, 5
      %p167 = scmp.ne.s32.totalorder %s162, %s164
      %p168 = scmp.eq.s32.totalorder %s19, 0
      %p169 = por %p167, %p168
      %p170 = scmp.ne.s32.totalorder %s162, %s164
      %p171 = scmp.eq.s32.totalorder %s24, 5
      %p172 = por %p170, %p171
      %p173 = scmp.ne.s32.totalorder %s164, %s165
      %p174 = scmp.eq.s32.totalorder %s24, 0
      %p175 = por %p173, %p174
      %p176 = scmp.ne.s32.totalorder %s164, %s165
      %p177 = scmp.eq.s32.totalorder %s25, 5
      %p178 = por %p176, %p177
      %p180 = scmp.ne.s32.totalorder %s165, %s179
      %p181 = scmp.eq.s32.totalorder %s25, 0
      %p182 = por %p180, %p181
      %s184 = sadd.s32 %s183, 1
      %p187 = scmp.eq.s32.totalorder %s19, 5
      %p188 = scmp.ne.s32.totalorder %s183, %s185
      %p189 = scmp.eq.s32.totalorder %s19, 0
      %p190 = por %p188, %p189
      %p191 = scmp.ne.s32.totalorder %s183, %s185
      %p192 = scmp.eq.s32.totalorder %s24, 5
      %p193 = por %p191, %p192
      %p194 = scmp.ne.s32.totalorder %s185, %s186
      %p195 = scmp.eq.s32.totalorder %s24, 0
      %p196 = por %p194, %p195
      %p197 = scmp.ne.s32.totalorder %s185, %s186
      %p198 = scmp.eq.s32.totalorder %s25, 5
      %p199 = por %p197, %p198
      %p201 = scmp.ne.s32.totalorder %s186, %s200
      %p202 = scmp.eq.s32.totalorder %s25, 0
      %p203 = por %p201, %p202
      %s205 = sadd.s32 %s204, 1
      %p208 = scmp.eq.s32.totalorder %s19, 5
      %p209 = scmp.ne.s32.totalorder %s204, %s206
      %p210 = scmp.eq.s32.totalorder %s19, 0
      %p211 = por %p209, %p210
      %p212 = scmp.ne.s32.totalorder %s204, %s206
      %p213 = scmp.eq.s32.totalorder %s24, 5
      %p214 = por %p212, %p213
      %p215 = scmp.ne.s32.totalorder %s206, %s207
      %p216 = scmp.eq.s32.totalorder %s24, 0
      %p217 = por %p215, %p216
      %p218 = scmp.ne.s32.totalorder %s206, %s207
      %p219 = scmp.eq.s32.totalorder %s25, 5
      %p220 = por %p218, %p219
      %p222 = scmp.ne.s32.totalorder %s207, %s221
      %p223 = scmp.eq.s32.totalorder %s25, 0
      %p224 = por %p222, %p223
      %s226 = sadd.s32 %s225, 1
      %p229 = scmp.eq.s32.totalorder %s19, 5
      %p230 = scmp.ne.s32.totalorder %s225, %s227
      %p231 = scmp.eq.s32.totalorder %s19, 0
      %p232 = por %p230, %p231
      %p233 = scmp.ne.s32.totalorder %s225, %s227
      %p234 = scmp.eq.s32.totalorder %s24, 5
      %p235 = por %p233, %p234
      %p236 = scmp.ne.s32.totalorder %s227, %s228
      %p237 = scmp.eq.s32.totalorder %s24, 0
      %p238 = por %p236, %p237
      %p239 = scmp.ne.s32.totalorder %s227, %s228
      %p240 = scmp.eq.s32.totalorder %s25, 5
      %p241 = por %p239, %p240
      %p243 = scmp.ne.s32.totalorder %s228, %s242
      %p244 = scmp.eq.s32.totalorder %s25, 0
      %p245 = por %p243, %p244
      %s247 = sadd.s32 %s246, 1
      %p250 = scmp.eq.s32.totalorder %s19, 5
      %p251 = scmp.ne.s32.totalorder %s246, %s248
      %p252 = scmp.eq.s32.totalorder %s19, 0
      %p253 = por %p251, %p252
      %p254 = scmp.ne.s32.totalorder %s246, %s248
      %p255 = scmp.eq.s32.totalorder %s24, 5
      %p256 = por %p254, %p255
      %p257 = scmp.ne.s32.totalorder %s248, %s249
      %p258 = scmp.eq.s32.totalorder %s24, 0
      %p259 = por %p257, %p258
      %p260 = scmp.ne.s32.totalorder %s248, %s249
      %p261 = scmp.eq.s32.totalorder %s25, 5
      %p262 = por %p260, %p261
      %p264 = scmp.ne.s32.totalorder %s249, %s263
      %p265 = scmp.eq.s32.totalorder %s25, 0
      %p266 = por %p264, %p265
      %s268 = sadd.s32 %s267, 1
      %p271 = scmp.eq.s32.totalorder %s19, 5
      %p272 = scmp.ne.s32.totalorder %s267, %s269
      %p273 = scmp.eq.s32.totalorder %s19, 0
      %p274 = por %p272, %p273
      %p275 = scmp.ne.s32.totalorder %s267, %s269
      %p276 = scmp.eq.s32.totalorder %s24, 5
      %p277 = por %p275, %p276
      %p278 = scmp.ne.s32.totalorder %s269, %s270
      %p279 = scmp.eq.s32.totalorder %s24, 0
      %p280 = por %p278, %p279
      %p281 = scmp.ne.s32.totalorder %s269, %s270
      %p282 = scmp.eq.s32.totalorder %s25, 5
      %p283 = por %p281, %p282
      %p285 = scmp.ne.s32.totalorder %s270, %s284
      %p286 = scmp.eq.s32.totalorder %s25, 0
      %p287 = por %p285, %p286
      %s289 = sadd.s32 %s288, 1
      %p292 = scmp.eq.s32.totalorder %s19, 5
      %p293 = scmp.ne.s32.totalorder %s288, %s290
      %p294 = scmp.eq.s32.totalorder %s19, 0
      %p295 = por %p293, %p294
      %p296 = scmp.ne.s32.totalorder %s288, %s290
      %p297 = scmp.eq.s32.totalorder %s24, 5
      %p298 = por %p296, %p297
      %p299 = scmp.ne.s32.totalorder %s290, %s291
      %p300 = scmp.eq.s32.totalorder %s24, 0
      %p301 = por %p299, %p300
      %p302 = scmp.ne.s32.totalorder %s290, %s291
      %p303 = scmp.eq.s32.totalorder %s25, 5
      %p304 = por %p302, %p303
      %p306 = scmp.ne.s32.totalorder %s291, %s305
      %p307 = scmp.eq.s32.totalorder %s25, 0
      %p308 = por %p306, %p307
      %s310 = sadd.s32 %s309, 1
      %p313 = scmp.eq.s32.totalorder %s19, 5
      %p314 = scmp.ne.s32.totalorder %s309, %s311
      %p315 = scmp.eq.s32.totalorder %s19, 0
      %p316 = por %p314, %p315
      %p317 = scmp.ne.s32.totalorder %s309, %s311
      %p318 = scmp.eq.s32.totalorder %s24, 5
      %p319 = por %p317, %p318
      %p320 = scmp.ne.s32.totalorder %s311, %s312
      %p321 = scmp.eq.s32.totalorder %s24, 0
      %p322 = por %p320, %p321
      %p323 = scmp.ne.s32.totalorder %s311, %s312
      %p324 = scmp.eq.s32.totalorder %s25, 5
      %p325 = por %p323, %p324
      %p327 = scmp.ne.s32.totalorder %s312, %s326
      %p328 = scmp.eq.s32.totalorder %s25, 0
      %p329 = por %p327, %p328
      %s331 = sadd.s32 %s330, 1
      %p334 = scmp.eq.s32.totalorder %s19, 5
      %p335 = scmp.ne.s32.totalorder %s330, %s332
      %p336 = scmp.eq.s32.totalorder %s19, 0
      %p337 = por %p335, %p336
      %p338 = scmp.ne.s32.totalorder %s330, %s332
      %p339 = scmp.eq.s32.totalorder %s24, 5
      %p340 = por %p338, %p339
      %p341 = scmp.ne.s32.totalorder %s332, %s333
      %p342 = scmp.eq.s32.totalorder %s24, 0
      %p343 = por %p341, %p342
      %p344 = scmp.ne.s32.totalorder %s332, %s333
      %p345 = scmp.eq.s32.totalorder %s25, 5
      %p346 = por %p344, %p345
      %p348 = scmp.ne.s32.totalorder %s333, %s347
      %p349 = scmp.eq.s32.totalorder %s25, 0
      %p350 = por %p348, %p349
      %p351 = scmp.le.s32.totalorder 1, %s19
      %p352 = scmp.lt.s32.totalorder %s19, 7
      %p353 = pnand %p351, %p352
      %p354 = pneg %p353
      // Predicated region
      $region9: #{t_hop_forward.1} parent=5 // pred_check
        _
      $region10: #{t_hop_forward.1} parent=5 // pred_check_branch
        %356 = sbr.rel (%p353) target = $region12
      $region11: #{t_hop_forward.1} parent=5 // pred_region
        %s357 = ssub.s32 %s19, 1
        // Predicated region
        $region13: #{t_hop_forward.1} parent=11 // pred_check
          %p358 = pneg %p154
        $region14: #{t_hop_forward.1} parent=11 // pred_check_branch
          %360 = sbr.rel (%p358) target = $region16
        $region15: #{t_hop_forward.1} parent=11 // pred_region
          _
        $region16: #{t_hop_forward.1} parent=11 // pred_fallthru
          _
        // Predicated region
        $region17: #{t_hop_forward.1} parent=11 // pred_check
          %p361 = pneg %p175
        $region18: #{t_hop_forward.1} parent=11 // pred_check_branch
          %363 = sbr.rel (%p361) target = $region20
        $region19: #{t_hop_forward.1} parent=11 // pred_region
          _
        $region20: #{t_hop_forward.1} parent=11 // pred_fallthru
          _
        // Predicated region
        $region21: #{t_hop_forward.1} parent=11 // pred_check
          %p364 = pneg %p196
        $region22: #{t_hop_forward.1} parent=11 // pred_check_branch
          %366 = sbr.rel (%p364) target = $region24
        $region23: #{t_hop_forward.1} parent=11 // pred_region
          _
        $region24: #{t_hop_forward.1} parent=11 // pred_fallthru
          _
        // Predicated region
        $region25: #{t_hop_forward.1} parent=11 // pred_check
          %p367 = pneg %p217
        $region26: #{t_hop_forward.1} parent=11 // pred_check_branch
          %369 = sbr.rel (%p367) target = $region28
        $region27: #{t_hop_forward.1} parent=11 // pred_region
          _
        $region28: #{t_hop_forward.1} parent=11 // pred_fallthru
          _
        // Predicated region
        $region29: #{t_hop_forward.1} parent=11 // pred_check
          %p370 = pneg %p238
        $region30: #{t_hop_forward.1} parent=11 // pred_check_branch
          %372 = sbr.rel (%p370) target = $region32
        $region31: #{t_hop_forward.1} parent=11 // pred_region
          _
        $region32: #{t_hop_forward.1} parent=11 // pred_fallthru
          _
        // Predicated region
        $region33: #{t_hop_forward.1} parent=11 // pred_check
          %p373 = pneg %p259
        $region34: #{t_hop_forward.1} parent=11 // pred_check_branch
          %375 = sbr.rel (%p373) target = $region36
        $region35: #{t_hop_forward.1} parent=11 // pred_region
          _
        $region36: #{t_hop_forward.1} parent=11 // pred_fallthru
          _
        // Predicated region
        $region37: #{t_hop_forward.1} parent=11 // pred_check
          %p376 = pneg %p280
        $region38: #{t_hop_forward.1} parent=11 // pred_check_branch
          %378 = sbr.rel (%p376) target = $region40
        $region39: #{t_hop_forward.1} parent=11 // pred_region
          _
        $region40: #{t_hop_forward.1} parent=11 // pred_fallthru
          _
        // Predicated region
        $region41: #{t_hop_forward.1} parent=11 // pred_check
          %p379 = pneg %p301
        $region42: #{t_hop_forward.1} parent=11 // pred_check_branch
          %381 = sbr.rel (%p379) target = $region44
        $region43: #{t_hop_forward.1} parent=11 // pred_region
          _
        $region44: #{t_hop_forward.1} parent=11 // pred_fallthru
          _
        // Predicated region
        $region45: #{t_hop_forward.1} parent=11 // pred_check
          %p382 = pneg %p322
        $region46: #{t_hop_forward.1} parent=11 // pred_check_branch
          %384 = sbr.rel (%p382) target = $region48
        $region47: #{t_hop_forward.1} parent=11 // pred_region
          _
        $region48: #{t_hop_forward.1} parent=11 // pred_fallthru
          _
      $region12: #{t_hop_forward.1} parent=5 // pred_fallthru
        _
      %p385 = scmp.lt.s32.totalorder %s19, 6
      // Predicated region
      $region49: #{t_hop_forward.1} parent=5 // pred_check
        %p386 = pneg %p385
      $region50: #{t_hop_forward.1} parent=5 // pred_check_branch
        %388 = sbr.rel (%p386) target = $region52
      $region51: #{t_hop_forward.1} parent=5 // pred_region
        // Predicated region
        $region53: #{t_hop_forward.1} parent=51 // pred_check
          %p389 = pneg %p59
        $region54: #{t_hop_forward.1} parent=51 // pred_check_branch
          %391 = sbr.rel (%p389) target = $region56
        $region55: #{t_hop_forward.1} parent=51 // pred_region
          %p392 = scmp.lt.s32.totalorder %s26, 1
          %s393 = scalar_select %p392, %s26, 1
          %s394 = ssub.s32 1, %s393
          %s395 = smul.u32 %s27, %s394
          %p396 = scmp.lt.s32.totalorder %s395, 1
          %s397 = scalar_select %p396, %s395, 1
          %s398 = smul.addr %s397, 2
          %s399 = smul.addr %s398, 8
          %s400 = scalar_lea.vmem %s0, %s399
          %p401 = scmp.lt.s32.totalorder %s26, 1
          %s402 = scalar_select %p401, %s26, 1
          %s403 = ssub.s32 1, %s402
          %s404 = smul.u32 %s27, %s403
        $region56: #{t_hop_forward.1} parent=51 // pred_fallthru
          _
        // Predicated region
        $region57: #{t_hop_forward.1} parent=51 // pred_check
          %p405 = pneg %p93
        $region58: #{t_hop_forward.1} parent=51 // pred_check_branch
          %407 = sbr.rel (%p405) target = $region60
        $region59: #{t_hop_forward.1} parent=51 // pred_region
          %p408 = scmp.lt.s32.totalorder %s26, 1
          %s409 = scalar_select %p408, %s26, 1
          %s410 = ssub.s32 1, %s409
          %s411 = smul.u32 %s27, %s410
          %p412 = scmp.lt.s32.totalorder %s411, 1
          %s413 = scalar_select %p412, %s411, 1
          %s414 = smul.addr %s413, 2
          %s415 = smul.addr %s414, 8
          %s416 = scalar_lea.vmem %s1, %s415
          %p417 = scmp.lt.s32.totalorder %s26, 1
          %s418 = scalar_select %p417, %s26, 1
          %s419 = ssub.s32 1, %s418
          %s420 = smul.u32 %s27, %s419
        $region60: #{t_hop_forward.1} parent=51 // pred_fallthru
          _
        // Predicated region
        $region61: #{t_hop_forward.1} parent=51 // pred_check
          %p421 = pneg %p127
        $region62: #{t_hop_forward.1} parent=51 // pred_check_branch
          %423 = sbr.rel (%p421) target = $region64
        $region63: #{t_hop_forward.1} parent=51 // pred_region
          %p424 = scmp.lt.s32.totalorder %s26, 1
          %s425 = scalar_select %p424, %s26, 1
          %s426 = ssub.s32 1, %s425
          %s427 = smul.u32 %s27, %s426
          %p428 = scmp.lt.s32.totalorder %s427, 1
          %s429 = scalar_select %p428, %s427, 1
          %s430 = smul.addr %s429, 32
          %s431 = smul.addr %s430, 4
          %s432 = scalar_lea.vmem %s2, %s431
          %p433 = scmp.lt.s32.totalorder %s26, 1
          %s434 = scalar_select %p433, %s26, 1
          %s435 = ssub.s32 1, %s434
          %s436 = smul.u32 %s27, %s435
        $region64: #{t_hop_forward.1} parent=51 // pred_fallthru
          _
      $region52: #{t_hop_forward.1} parent=5 // pred_fallthru
        _
      %p437 = scmp.le.s32.totalorder 1, %s19
      %p438 = scmp.lt.s32.totalorder %s19, 7
      %p439 = pnand %p437, %p438
      %p440 = pneg %p439
      // Predicated region
      $region65: #{t_hop_forward.1} parent=5 // pred_check
        _
      $region66: #{t_hop_forward.1} parent=5 // pred_check_branch
        %442 = sbr.rel (%p439) target = $region68
      $region67: #{t_hop_forward.1} parent=5 // pred_region
        %s443 = ssub.s32 %s19, 1
        %p444 = scmp.lt.s32.totalorder %s28, 1
        %s445 = scalar_select %p444, %s28, 1
        %s446 = ssub.s32 1, %s445
        %s447 = smul.u32 %s29, %s446
        %p448 = scmp.lt.s32.totalorder %s447, 1
        %s449 = scalar_select %p448, %s447, 1
        %s450 = smul.addr %s449, 2
        %s451 = smul.addr %s450, 8
        %s452 = scalar_lea.vmem %s0, %s451
        %p453 = pneg %p65
        %p454 = pneg %p62
        %p455 = scmp.lt.s32.totalorder %s28, 1
        %s456 = scalar_select %p455, %s28, 1
        %s457 = ssub.s32 1, %s456
        %s458 = smul.u32 %s29, %s457
        %p459 = scmp.lt.s32.totalorder %s458, 1
        %s460 = scalar_select %p459, %s458, 1
        %s461 = smul.addr %s460, 2
        %s462 = smul.addr %s461, 8
        %s463 = scalar_lea.vmem %s1, %s462
        %p464 = pneg %p99
        %p465 = pneg %p96
        %p466 = scmp.lt.s32.totalorder %s28, 1
        %s467 = scalar_select %p466, %s28, 1
        %s468 = ssub.s32 1, %s467
        %s469 = smul.u32 %s29, %s468
        %p470 = scmp.lt.s32.totalorder %s469, 1
        %s471 = scalar_select %p470, %s469, 1
        %s472 = smul.addr %s471, 32
        %s473 = smul.addr %s472, 4
        %s474 = scalar_lea.vmem %s2, %s473
        %p475 = pneg %p133
        %p476 = pneg %p130
        %p477 = pneg %p154
        %p478 = pneg %p151
        %p479 = pneg %p175
        %p480 = pneg %p172
        %p481 = pneg %p196
        %p482 = pneg %p193
        %p483 = pneg %p217
        %p484 = pneg %p214
        %p485 = pneg %p238
        %p486 = pneg %p235
        %p487 = pneg %p259
        %p488 = pneg %p256
        %p489 = pneg %p280
        %p490 = pneg %p277
        %p491 = pneg %p301
        %p492 = pneg %p298
        %p493 = pneg %p322
        %p494 = pneg %p319
        %p495 = pneg %p343
        %p496 = pneg %p340
        %p497 = scmp.lt.s32.totalorder %s28, 1
        %s498 = scalar_select %p497, %s28, 1
        %s499 = ssub.s32 1, %s498
        %s500 = smul.u32 %s29, %s499
        %p501 = scmp.lt.s32.totalorder %s500, 1
        %s502 = scalar_select %p501, %s500, 1
        %s503 = smul.addr %s502, 2
        %s504 = smul.addr %s503, 8
        %s505 = scalar_lea.vmem %s0, %s504
        %p506 = scmp.lt.s32.totalorder %s28, 1
        %s507 = scalar_select %p506, %s28, 1
        %s508 = ssub.s32 1, %s507
        %s509 = smul.u32 %s29, %s508
        %p510 = scmp.lt.s32.totalorder %s28, 1
        %s511 = scalar_select %p510, %s28, 1
        %s512 = ssub.s32 1, %s511
        %s513 = smul.u32 %s29, %s512
        %p514 = scmp.lt.s32.totalorder %s513, 1
        %s515 = scalar_select %p514, %s513, 1
        %s516 = smul.addr %s515, 2
        %s517 = smul.addr %s516, 8
        %s518 = scalar_lea.vmem %s1, %s517
        %p519 = scmp.lt.s32.totalorder %s28, 1
        %s520 = scalar_select %p519, %s28, 1
        %s521 = ssub.s32 1, %s520
        %s522 = smul.u32 %s29, %s521
        %p523 = scmp.lt.s32.totalorder %s28, 1
        %s524 = scalar_select %p523, %s28, 1
        %s525 = ssub.s32 1, %s524
        %s526 = smul.u32 %s29, %s525
        %p527 = scmp.lt.s32.totalorder %s526, 1
        %s528 = scalar_select %p527, %s526, 1
        %s529 = smul.addr %s528, 32
        %s530 = smul.addr %s529, 4
        %s531 = scalar_lea.vmem %s2, %s530
        %p532 = scmp.lt.s32.totalorder %s28, 1
        %s533 = scalar_select %p532, %s28, 1
        %s534 = ssub.s32 1, %s533
        %s535 = smul.u32 %s29, %s534
        %p536 = scmp.eq.s32.totalorder %s28, 0
        %p537 = scmp.eq.s32.totalorder %s29, 0
        %p538 = pnand %p536, %p537
        %p539 = pneg %p538
        // Predicated region
        $region69: #{t_hop_forward.1} parent=67 // pred_check
          _
        $region70: #{t_hop_forward.1} parent=67 // pred_check_branch
          %541 = sbr.rel (%p538) target = $region72
        $region71: #{t_hop_forward.1} parent=67 // pred_region
          %vm542 = vcmask 254976
          %543 = vst.msk [vmem:[#allocation4] sm:$0x3] %vm542, 0.0
          %544 = vst.msk [vmem:[#allocation5] sm:$0x3] %vm542, 0.0
        $region72: #{t_hop_forward.1} parent=67 // pred_fallthru
          _
        // Predicated region
        $region73: #{t_hop_forward.1} parent=67 // pred_check
          %p545 = pneg %p536
        $region74: #{t_hop_forward.1} parent=67 // pred_check_branch
          %547 = sbr.rel (%p545) target = $region76
        $region75: #{t_hop_forward.1} parent=67 // pred_region
          %v548 = vld [vmem:[%s505] sm:$0xff]
          %v549 = vld [vmem:[%s505 + $0x8] sm:$0xff]
          %v550 = vld [vmem:[%s518] sm:$0xff]
          %v551 = vld [vmem:[%s518 + $0x8] sm:$0xff]
          %v552 = vld [vmem:[%s531] sm:$0xf]
          %v553 = vld [vmem:[%s531 + $0x4] sm:$0xf]
          %v554 = vld [vmem:[%s531 + $0x8] sm:$0xf]
          %v555 = vld [vmem:[%s531 + $0xc] sm:$0xf]
          %v556 = vld [vmem:[%s531 + $0x10] sm:$0xf]
          %v557 = vld [vmem:[%s531 + $0x14] sm:$0xf]
          %v558 = vld [vmem:[%s531 + $0x18] sm:$0xf]
          %v559 = vld [vmem:[%s531 + $0x1c] sm:$0xf]
          %v560 = vld [vmem:[%s531 + $0x20] sm:$0xf]
          %v561 = vld [vmem:[%s531 + $0x24] sm:$0xf]
          %v562 = vld [vmem:[%s531 + $0x28] sm:$0xf]
          %v563 = vld [vmem:[%s531 + $0x2c] sm:$0xf]
          %v564 = vld [vmem:[%s531 + $0x30] sm:$0xf]
          %v565 = vld [vmem:[%s531 + $0x34] sm:$0xf]
          %v566 = vld [vmem:[%s531 + $0x38] sm:$0xf]
          %v567 = vld [vmem:[%s531 + $0x3c] sm:$0xf]
          %v568 = vld [vmem:[%s531 + $0x40] sm:$0xf]
          %v569 = vld [vmem:[%s531 + $0x44] sm:$0xf]
          %v570 = vld [vmem:[%s531 + $0x48] sm:$0xf]
          %v571 = vld [vmem:[%s531 + $0x4c] sm:$0xf]
          %v572 = vld [vmem:[%s531 + $0x50] sm:$0xf]
          %v573 = vld [vmem:[%s531 + $0x54] sm:$0xf]
          %v574 = vld [vmem:[%s531 + $0x58] sm:$0xf]
          %v575 = vld [vmem:[%s531 + $0x5c] sm:$0xf]
          %v576 = vld [vmem:[%s531 + $0x60] sm:$0xf]
          %v577 = vld [vmem:[%s531 + $0x64] sm:$0xf]
          %v578 = vld [vmem:[%s531 + $0x68] sm:$0xf]
          %v579 = vld [vmem:[%s531 + $0x6c] sm:$0xf]
          %v580 = vld [vmem:[%s531 + $0x70] sm:$0xf]
          %v581 = vld [vmem:[%s531 + $0x74] sm:$0xf]
          %v582 = vld [vmem:[%s531 + $0x78] sm:$0xf]
          %v583 = vld [vmem:[%s531 + $0x7c] sm:$0xf]
          %v584 = vunpack.c.l.bf16 %v552
          %v585 = vunpack.c.l.bf16 %v553
          %v586 = vunpack.c.l.bf16 %v554
          %v587 = vunpack.c.l.bf16 %v555
          %v588 = vunpack.c.l.bf16 %v556
          %v589 = vunpack.c.l.bf16 %v557
          %v590 = vunpack.c.l.bf16 %v558
          %v591 = vunpack.c.l.bf16 %v559
          %v592 = vunpack.c.l.bf16 %v560
          %v593 = vunpack.c.l.bf16 %v561
          %v594 = vunpack.c.l.bf16 %v562
          %v595 = vunpack.c.l.bf16 %v563
          %v596 = vunpack.c.l.bf16 %v564
          %v597 = vunpack.c.l.bf16 %v565
          %v598 = vunpack.c.l.bf16 %v566
          %v599 = vunpack.c.l.bf16 %v567
          %v600 = vunpack.c.l.bf16 %v568
          %v601 = vunpack.c.l.bf16 %v569
          %v602 = vunpack.c.l.bf16 %v570
          %v603 = vunpack.c.l.bf16 %v571
          %v604 = vunpack.c.l.bf16 %v572
          %v605 = vunpack.c.l.bf16 %v573
          %v606 = vunpack.c.l.bf16 %v574
          %v607 = vunpack.c.l.bf16 %v575
          %v608 = vunpack.c.l.bf16 %v576
          %v609 = vunpack.c.l.bf16 %v577
          %v610 = vunpack.c.l.bf16 %v578
          %v611 = vunpack.c.l.bf16 %v579
          %v612 = vunpack.c.l.bf16 %v580
          %v613 = vunpack.c.l.bf16 %v581
          %v614 = vunpack.c.l.bf16 %v582
          %v615 = vunpack.c.l.bf16 %v583
          %v616 = vld [vmem:[%s3 + $0x1] sm:$0x1]
          %v617 = vlaneseq
          %v618 = vshrl.u32 %v617, 7
          %v619 = vsub.s32 0, %v618
          %v620 = vrot.slane %v616, %v619
          %v621 = vmul.f32 %v584, %v620
          %v622 = vmul.f32 %v585, %v620
          %v623 = vmul.f32 %v586, %v620
          %v624 = vmul.f32 %v587, %v620
          %v625 = vmul.f32 %v588, %v620
          %v626 = vmul.f32 %v589, %v620
          %v627 = vmul.f32 %v590, %v620
          %v628 = vmul.f32 %v591, %v620
          %v629 = vmul.f32 %v592, %v620
          %v630 = vmul.f32 %v593, %v620
          %v631 = vmul.f32 %v594, %v620
          %v632 = vmul.f32 %v595, %v620
          %v633 = vmul.f32 %v596, %v620
          %v634 = vmul.f32 %v597, %v620
          %v635 = vmul.f32 %v598, %v620
          %v636 = vmul.f32 %v599, %v620
          %v637 = vmul.f32 %v600, %v620
          %v638 = vmul.f32 %v601, %v620
          %v639 = vmul.f32 %v602, %v620
          %v640 = vmul.f32 %v603, %v620
          %v641 = vmul.f32 %v604, %v620
          %v642 = vmul.f32 %v605, %v620
          %v643 = vmul.f32 %v606, %v620
          %v644 = vmul.f32 %v607, %v620
          %v645 = vmul.f32 %v608, %v620
          %v646 = vmul.f32 %v609, %v620
          %v647 = vmul.f32 %v610, %v620
          %v648 = vmul.f32 %v611, %v620
          %v649 = vmul.f32 %v612, %v620
          %v650 = vmul.f32 %v613, %v620
          %v651 = vmul.f32 %v614, %v620
          %v652 = vmul.f32 %v615, %v620
          %vm653 = vcmask 523264
          %v654 = vsel %vm653, %v621, 0.0
          %655 = vadd.xlane.f32.xlu0 %v654
          %v656 = vpop.xlane.xlu0 %655
          %v657 = vsel %vm653, %v622, 0.0
          %658 = vadd.xlane.f32.xlu0 %v657
          %v659 = vpop.xlane.xlu0 %658
          %v660 = vsel %vm653, %v623, 0.0
          %661 = vadd.xlane.f32.xlu0 %v660
          %v662 = vpop.xlane.xlu0 %661
          %v663 = vsel %vm653, %v624, 0.0
          %664 = vadd.xlane.f32.xlu0 %v663
          %v665 = vpop.xlane.xlu0 %664
          %v666 = vsel %vm653, %v625, 0.0
          %667 = vadd.xlane.f32.xlu0 %v666
          %v668 = vpop.xlane.xlu0 %667
          %v669 = vsel %vm653, %v626, 0.0
          %670 = vadd.xlane.f32.xlu0 %v669
          %v671 = vpop.xlane.xlu0 %670
          %v672 = vsel %vm653, %v627, 0.0
          %673 = vadd.xlane.f32.xlu0 %v672
          %v674 = vpop.xlane.xlu0 %673
          %v675 = vsel %vm653, %v628, 0.0
          %676 = vadd.xlane.f32.xlu0 %v675
          %v677 = vpop.xlane.xlu0 %676
          %v678 = vsel %vm653, %v629, 0.0
          %679 = vadd.xlane.f32.xlu0 %v678
          %v680 = vpop.xlane.xlu0 %679
          %v681 = vsel %vm653, %v630, 0.0
          %682 = vadd.xlane.f32.xlu0 %v681
          %v683 = vpop.xlane.xlu0 %682
          %v684 = vsel %vm653, %v631, 0.0
          %685 = vadd.xlane.f32.xlu0 %v684
          %v686 = vpop.xlane.xlu0 %685
          %v687 = vsel %vm653, %v632, 0.0
          %688 = vadd.xlane.f32.xlu0 %v687
          %v689 = vpop.xlane.xlu0 %688
          %v690 = vsel %vm653, %v633, 0.0
          %691 = vadd.xlane.f32.xlu0 %v690
          %v692 = vpop.xlane.xlu0 %691
          %v693 = vsel %vm653, %v634, 0.0
          %694 = vadd.xlane.f32.xlu0 %v693
          %v695 = vpop.xlane.xlu0 %694
          %v696 = vsel %vm653, %v635, 0.0
          %697 = vadd.xlane.f32.xlu0 %v696
          %v698 = vpop.xlane.xlu0 %697
          %v699 = vsel %vm653, %v636, 0.0
          %700 = vadd.xlane.f32.xlu0 %v699
          %v701 = vpop.xlane.xlu0 %700
          %v702 = vsel %vm653, %v637, 0.0
          %703 = vadd.xlane.f32.xlu0 %v702
          %v704 = vpop.xlane.xlu0 %703
          %v705 = vsel %vm653, %v638, 0.0
          %706 = vadd.xlane.f32.xlu0 %v705
          %v707 = vpop.xlane.xlu0 %706
          %v708 = vsel %vm653, %v639, 0.0
          %709 = vadd.xlane.f32.xlu0 %v708
          %v710 = vpop.xlane.xlu0 %709
          %v711 = vsel %vm653, %v640, 0.0
          %712 = vadd.xlane.f32.xlu0 %v711
          %v713 = vpop.xlane.xlu0 %712
          %v714 = vsel %vm653, %v641, 0.0
          %715 = vadd.xlane.f32.xlu0 %v714
          %v716 = vpop.xlane.xlu0 %715
          %v717 = vsel %vm653, %v642, 0.0
          %718 = vadd.xlane.f32.xlu0 %v717
          %v719 = vpop.xlane.xlu0 %718
          %v720 = vsel %vm653, %v643, 0.0
          %721 = vadd.xlane.f32.xlu0 %v720
          %v722 = vpop.xlane.xlu0 %721
          %v723 = vsel %vm653, %v644, 0.0
          %724 = vadd.xlane.f32.xlu0 %v723
          %v725 = vpop.xlane.xlu0 %724
          %v726 = vsel %vm653, %v645, 0.0
          %727 = vadd.xlane.f32.xlu0 %v726
          %v728 = vpop.xlane.xlu0 %727
          %v729 = vsel %vm653, %v646, 0.0
          %730 = vadd.xlane.f32.xlu0 %v729
          %v731 = vpop.xlane.xlu0 %730
          %v732 = vsel %vm653, %v647, 0.0
          %733 = vadd.xlane.f32.xlu0 %v732
          %v734 = vpop.xlane.xlu0 %733
          %v735 = vsel %vm653, %v648, 0.0
          %736 = vadd.xlane.f32.xlu0 %v735
          %v737 = vpop.xlane.xlu0 %736
          %v738 = vsel %vm653, %v649, 0.0
          %739 = vadd.xlane.f32.xlu0 %v738
          %v740 = vpop.xlane.xlu0 %739
          %v741 = vsel %vm653, %v650, 0.0
          %742 = vadd.xlane.f32.xlu0 %v741
          %v743 = vpop.xlane.xlu0 %742
          %v744 = vsel %vm653, %v651, 0.0
          %745 = vadd.xlane.f32.xlu0 %v744
          %v746 = vpop.xlane.xlu0 %745
          %v747 = vsel %vm653, %v652, 0.0
          %748 = vadd.xlane.f32.xlu0 %v747
          %v749 = vpop.xlane.xlu0 %748
          %751 = vrot.lane.b32.xlu0 %v616, 64
          %v752 = vpop.permute.xlu0 %751
          %s753 = vtos %v752
          %v754 = vstv %s753
          %v756 = vmul.f32 %v550, %v754
          %v757 = vmul.f32 %v551, %v754
          %v760 = vlaneseq
          %v761 = vshrl.u32 %v760, 7
          %v762 = vsub.s32 0, %v761
          %v763 = vrot.slane %v756, %v762
          %765 = vbcast.lane.b32.xlu0 %v763, 256
          %v766 = vpop.permute.xlu0 %765
          %s768 = sor.u32 256, 8
          %769 = vbcast.lane.b32.xlu0 %v763, %s768
          %v770 = vpop.permute.xlu0 %769
          %v771 = vlaneseq
          %v772 = vshrl.u32 %v771, 7
          %v773 = vsub.s32 1, %v772
          %v774 = vrot.slane %v756, %v773
          %776 = vbcast.lane.b32.xlu0 %v774, 256
          %v777 = vpop.permute.xlu0 %776
          %s779 = sor.u32 256, 8
          %780 = vbcast.lane.b32.xlu0 %v774, %s779
          %v781 = vpop.permute.xlu0 %780
          %v782 = vlaneseq
          %v783 = vshrl.u32 %v782, 7
          %v784 = vsub.s32 2, %v783
          %v785 = vrot.slane %v756, %v784
          %787 = vbcast.lane.b32.xlu0 %v785, 256
          %v788 = vpop.permute.xlu0 %787
          %s790 = sor.u32 256, 8
          %791 = vbcast.lane.b32.xlu0 %v785, %s790
          %v792 = vpop.permute.xlu0 %791
          %v793 = vlaneseq
          %v794 = vshrl.u32 %v793, 7
          %v795 = vsub.s32 3, %v794
          %v796 = vrot.slane %v756, %v795
          %798 = vbcast.lane.b32.xlu0 %v796, 256
          %v799 = vpop.permute.xlu0 %798
          %s801 = sor.u32 256, 8
          %802 = vbcast.lane.b32.xlu0 %v796, %s801
          %v803 = vpop.permute.xlu0 %802
          %v804 = vlaneseq
          %v805 = vshrl.u32 %v804, 7
          %v806 = vsub.s32 4, %v805
          %v807 = vrot.slane %v756, %v806
          %809 = vbcast.lane.b32.xlu0 %v807, 256
          %v810 = vpop.permute.xlu0 %809
          %s812 = sor.u32 256, 8
          %813 = vbcast.lane.b32.xlu0 %v807, %s812
          %v814 = vpop.permute.xlu0 %813
          %v815 = vlaneseq
          %v816 = vshrl.u32 %v815, 7
          %v817 = vsub.s32 5, %v816
          %v818 = vrot.slane %v756, %v817
          %820 = vbcast.lane.b32.xlu0 %v818, 256
          %v821 = vpop.permute.xlu0 %820
          %s823 = sor.u32 256, 8
          %824 = vbcast.lane.b32.xlu0 %v818, %s823
          %v825 = vpop.permute.xlu0 %824
          %v826 = vlaneseq
          %v827 = vshrl.u32 %v826, 7
          %v828 = vsub.s32 6, %v827
          %v829 = vrot.slane %v756, %v828
          %831 = vbcast.lane.b32.xlu0 %v829, 256
          %v832 = vpop.permute.xlu0 %831
          %s834 = sor.u32 256, 8
          %835 = vbcast.lane.b32.xlu0 %v829, %s834
          %v836 = vpop.permute.xlu0 %835
          %v837 = vlaneseq
          %v838 = vshrl.u32 %v837, 7
          %v839 = vsub.s32 7, %v838
          %v840 = vrot.slane %v756, %v839
          %842 = vbcast.lane.b32.xlu0 %v840, 256
          %v843 = vpop.permute.xlu0 %842
          %s845 = sor.u32 256, 8
          %846 = vbcast.lane.b32.xlu0 %v840, %s845
          %v847 = vpop.permute.xlu0 %846
          %v848 = vlaneseq
          %v849 = vshrl.u32 %v848, 7
          %v850 = vsub.s32 0, %v849
          %v851 = vrot.slane %v757, %v850
          %853 = vbcast.lane.b32.xlu0 %v851, 256
          %v854 = vpop.permute.xlu0 %853
          %s856 = sor.u32 256, 8
          %857 = vbcast.lane.b32.xlu0 %v851, %s856
          %v858 = vpop.permute.xlu0 %857
          %v859 = vlaneseq
          %v860 = vshrl.u32 %v859, 7
          %v861 = vsub.s32 1, %v860
          %v862 = vrot.slane %v757, %v861
          %864 = vbcast.lane.b32.xlu0 %v862, 256
          %v865 = vpop.permute.xlu0 %864
          %s867 = sor.u32 256, 8
          %868 = vbcast.lane.b32.xlu0 %v862, %s867
          %v869 = vpop.permute.xlu0 %868
          %v870 = vlaneseq
          %v871 = vshrl.u32 %v870, 7
          %v872 = vsub.s32 2, %v871
          %v873 = vrot.slane %v757, %v872
          %875 = vbcast.lane.b32.xlu0 %v873, 256
          %v876 = vpop.permute.xlu0 %875
          %s878 = sor.u32 256, 8
          %879 = vbcast.lane.b32.xlu0 %v873, %s878
          %v880 = vpop.permute.xlu0 %879
          %v881 = vlaneseq
          %v882 = vshrl.u32 %v881, 7
          %v883 = vsub.s32 3, %v882
          %v884 = vrot.slane %v757, %v883
          %886 = vbcast.lane.b32.xlu0 %v884, 256
          %v887 = vpop.permute.xlu0 %886
          %s889 = sor.u32 256, 8
          %890 = vbcast.lane.b32.xlu0 %v884, %s889
          %v891 = vpop.permute.xlu0 %890
          %v892 = vlaneseq
          %v893 = vshrl.u32 %v892, 7
          %v894 = vsub.s32 4, %v893
          %v895 = vrot.slane %v757, %v894
          %897 = vbcast.lane.b32.xlu0 %v895, 256
          %v898 = vpop.permute.xlu0 %897
          %s900 = sor.u32 256, 8
          %901 = vbcast.lane.b32.xlu0 %v895, %s900
          %v902 = vpop.permute.xlu0 %901
          %v903 = vlaneseq
          %v904 = vshrl.u32 %v903, 7
          %v905 = vsub.s32 5, %v904
          %v906 = vrot.slane %v757, %v905
          %908 = vbcast.lane.b32.xlu0 %v906, 256
          %v909 = vpop.permute.xlu0 %908
          %s911 = sor.u32 256, 8
          %912 = vbcast.lane.b32.xlu0 %v906, %s911
          %v913 = vpop.permute.xlu0 %912
          %v914 = vlaneseq
          %v915 = vshrl.u32 %v914, 7
          %v916 = vsub.s32 6, %v915
          %v917 = vrot.slane %v757, %v916
          %919 = vbcast.lane.b32.xlu0 %v917, 256
          %v920 = vpop.permute.xlu0 %919
          %s922 = sor.u32 256, 8
          %923 = vbcast.lane.b32.xlu0 %v917, %s922
          %v924 = vpop.permute.xlu0 %923
          %v925 = vlaneseq
          %v926 = vshrl.u32 %v925, 7
          %v927 = vsub.s32 7, %v926
          %v928 = vrot.slane %v757, %v927
          %930 = vbcast.lane.b32.xlu0 %v928, 256
          %v931 = vpop.permute.xlu0 %930
          %s933 = sor.u32 256, 8
          %934 = vbcast.lane.b32.xlu0 %v928, %s933
          %v935 = vpop.permute.xlu0 %934
          %v968 = vadd.f32 %v656, %v766
          %v969 = vadd.f32 %v659, %v770
          %v970 = vadd.f32 %v662, %v777
          %v971 = vadd.f32 %v665, %v781
          %v972 = vadd.f32 %v668, %v788
          %v973 = vadd.f32 %v671, %v792
          %v974 = vadd.f32 %v674, %v799
          %v975 = vadd.f32 %v677, %v803
          %v976 = vadd.f32 %v680, %v810
          %v977 = vadd.f32 %v683, %v814
          %v978 = vadd.f32 %v686, %v821
          %v979 = vadd.f32 %v689, %v825
          %v980 = vadd.f32 %v692, %v832
          %v981 = vadd.f32 %v695, %v836
          %v982 = vadd.f32 %v698, %v843
          %v983 = vadd.f32 %v701, %v847
          %v984 = vadd.f32 %v704, %v854
          %v985 = vadd.f32 %v707, %v858
          %v986 = vadd.f32 %v710, %v865
          %v987 = vadd.f32 %v713, %v869
          %v988 = vadd.f32 %v716, %v876
          %v989 = vadd.f32 %v719, %v880
          %v990 = vadd.f32 %v722, %v887
          %v991 = vadd.f32 %v725, %v891
          %v992 = vadd.f32 %v728, %v898
          %v993 = vadd.f32 %v731, %v902
          %v994 = vadd.f32 %v734, %v909
          %v995 = vadd.f32 %v737, %v913
          %v996 = vadd.f32 %v740, %v920
          %v997 = vadd.f32 %v743, %v924
          %v998 = vadd.f32 %v746, %v931
          %v999 = vadd.f32 %v749, %v935
          %1032 = vset.pattern.permute.xlu0 0
          %1033 = vperm.xlu0 %1032, %v968
          %v1034 = vpop.permute.xlu0 %1033
          %1035 = vset.pattern.permute.xlu0 0
          %1036 = vperm.xlu0 %1035, %v969
          %v1037 = vpop.permute.xlu0 %1036
          %1038 = vset.pattern.permute.xlu0 0
          %1039 = vperm.xlu0 %1038, %v970
          %v1040 = vpop.permute.xlu0 %1039
          %1041 = vset.pattern.permute.xlu0 0
          %1042 = vperm.xlu0 %1041, %v971
          %v1043 = vpop.permute.xlu0 %1042
          %1044 = vset.pattern.permute.xlu0 0
          %1045 = vperm.xlu0 %1044, %v972
          %v1046 = vpop.permute.xlu0 %1045
          %1047 = vset.pattern.permute.xlu0 0
          %1048 = vperm.xlu0 %1047, %v973
          %v1049 = vpop.permute.xlu0 %1048
          %1050 = vset.pattern.permute.xlu0 0
          %1051 = vperm.xlu0 %1050, %v974
          %v1052 = vpop.permute.xlu0 %1051
          %1053 = vset.pattern.permute.xlu0 0
          %1054 = vperm.xlu0 %1053, %v975
          %v1055 = vpop.permute.xlu0 %1054
          %1056 = vset.pattern.permute.xlu0 0
          %1057 = vperm.xlu0 %1056, %v976
          %v1058 = vpop.permute.xlu0 %1057
          %1059 = vset.pattern.permute.xlu0 0
          %1060 = vperm.xlu0 %1059, %v977
          %v1061 = vpop.permute.xlu0 %1060
          %1062 = vset.pattern.permute.xlu0 0
          %1063 = vperm.xlu0 %1062, %v978
          %v1064 = vpop.permute.xlu0 %1063
          %1065 = vset.pattern.permute.xlu0 0
          %1066 = vperm.xlu0 %1065, %v979
          %v1067 = vpop.permute.xlu0 %1066
          %1068 = vset.pattern.permute.xlu0 0
          %1069 = vperm.xlu0 %1068, %v980
          %v1070 = vpop.permute.xlu0 %1069
          %1071 = vset.pattern.permute.xlu0 0
          %1072 = vperm.xlu0 %1071, %v981
          %v1073 = vpop.permute.xlu0 %1072
          %1074 = vset.pattern.permute.xlu0 0
          %1075 = vperm.xlu0 %1074, %v982
          %v1076 = vpop.permute.xlu0 %1075
          %1077 = vset.pattern.permute.xlu0 0
          %1078 = vperm.xlu0 %1077, %v983
          %v1079 = vpop.permute.xlu0 %1078
          %1080 = vset.pattern.permute.xlu0 0
          %1081 = vperm.xlu0 %1080, %v984
          %v1082 = vpop.permute.xlu0 %1081
          %1083 = vset.pattern.permute.xlu0 0
          %1084 = vperm.xlu0 %1083, %v985
          %v1085 = vpop.permute.xlu0 %1084
          %1086 = vset.pattern.permute.xlu0 0
          %1087 = vperm.xlu0 %1086, %v986
          %v1088 = vpop.permute.xlu0 %1087
          %1089 = vset.pattern.permute.xlu0 0
          %1090 = vperm.xlu0 %1089, %v987
          %v1091 = vpop.permute.xlu0 %1090
          %1092 = vset.pattern.permute.xlu0 0
          %1093 = vperm.xlu0 %1092, %v988
          %v1094 = vpop.permute.xlu0 %1093
          %1095 = vset.pattern.permute.xlu0 0
          %1096 = vperm.xlu0 %1095, %v989
          %v1097 = vpop.permute.xlu0 %1096
          %1098 = vset.pattern.permute.xlu0 0
          %1099 = vperm.xlu0 %1098, %v990
          %v1100 = vpop.permute.xlu0 %1099
          %1101 = vset.pattern.permute.xlu0 0
          %1102 = vperm.xlu0 %1101, %v991
          %v1103 = vpop.permute.xlu0 %1102
          %1104 = vset.pattern.permute.xlu0 0
          %1105 = vperm.xlu0 %1104, %v992
          %v1106 = vpop.permute.xlu0 %1105
          %1107 = vset.pattern.permute.xlu0 0
          %1108 = vperm.xlu0 %1107, %v993
          %v1109 = vpop.permute.xlu0 %1108
          %1110 = vset.pattern.permute.xlu0 0
          %1111 = vperm.xlu0 %1110, %v994
          %v1112 = vpop.permute.xlu0 %1111
          %1113 = vset.pattern.permute.xlu0 0
          %1114 = vperm.xlu0 %1113, %v995
          %v1115 = vpop.permute.xlu0 %1114
          %1116 = vset.pattern.permute.xlu0 0
          %1117 = vperm.xlu0 %1116, %v996
          %v1118 = vpop.permute.xlu0 %1117
          %1119 = vset.pattern.permute.xlu0 0
          %1120 = vperm.xlu0 %1119, %v997
          %v1121 = vpop.permute.xlu0 %1120
          %1122 = vset.pattern.permute.xlu0 0
          %1123 = vperm.xlu0 %1122, %v998
          %v1124 = vpop.permute.xlu0 %1123
          %1125 = vset.pattern.permute.xlu0 0
          %1126 = vperm.xlu0 %1125, %v999
          %v1127 = vpop.permute.xlu0 %1126
          %v1128 = vlaneseq
          %v1129 = vand.u32 %v1128, 127
          %v1130 = vlaneseq
          %v1131 = vshrl.u32 %v1130, 7
          %v1132 = vsub.s32 %v1129, %v1131
          %v1133 = vrot.slane %v1034, %v1132
          %v1134 = vadd.s32 %v1129, 4294967288
          %v1135 = vlaneseq
          %v1136 = vshrl.u32 %v1135, 7
          %v1137 = vsub.s32 %v1134, %v1136
          %v1138 = vrot.slane %v1037, %v1137
          %vm1139 = vcmask 130112
          %v1140 = vsel %vm1139, %v1138, %v1133
          %v1141 = vlaneseq
          %v1142 = vshrl.u32 %v1141, 7
          %v1143 = vsub.s32 %v1129, %v1142
          %v1144 = vrot.slane %v1040, %v1143
          %v1145 = vlaneseq
          %v1146 = vshrl.u32 %v1145, 7
          %v1147 = vsub.s32 %v1134, %v1146
          %v1148 = vrot.slane %v1043, %v1147
          %v1149 = vsel %vm1139, %v1148, %v1144
          %v1150 = vlaneseq
          %v1151 = vshrl.u32 %v1150, 7
          %v1152 = vsub.s32 %v1129, %v1151
          %v1153 = vrot.slane %v1046, %v1152
          %v1154 = vlaneseq
          %v1155 = vshrl.u32 %v1154, 7
          %v1156 = vsub.s32 %v1134, %v1155
          %v1157 = vrot.slane %v1049, %v1156
          %v1158 = vsel %vm1139, %v1157, %v1153
          %v1159 = vlaneseq
          %v1160 = vshrl.u32 %v1159, 7
          %v1161 = vsub.s32 %v1129, %v1160
          %v1162 = vrot.slane %v1052, %v1161
          %v1163 = vlaneseq
          %v1164 = vshrl.u32 %v1163, 7
          %v1165 = vsub.s32 %v1134, %v1164
          %v1166 = vrot.slane %v1055, %v1165
          %v1167 = vsel %vm1139, %v1166, %v1162
          %v1168 = vlaneseq
          %v1169 = vshrl.u32 %v1168, 7
          %v1170 = vsub.s32 %v1129, %v1169
          %v1171 = vrot.slane %v1058, %v1170
          %v1172 = vlaneseq
          %v1173 = vshrl.u32 %v1172, 7
          %v1174 = vsub.s32 %v1134, %v1173
          %v1175 = vrot.slane %v1061, %v1174
          %v1176 = vsel %vm1139, %v1175, %v1171
          %v1177 = vlaneseq
          %v1178 = vshrl.u32 %v1177, 7
          %v1179 = vsub.s32 %v1129, %v1178
          %v1180 = vrot.slane %v1064, %v1179
          %v1181 = vlaneseq
          %v1182 = vshrl.u32 %v1181, 7
          %v1183 = vsub.s32 %v1134, %v1182
          %v1184 = vrot.slane %v1067, %v1183
          %v1185 = vsel %vm1139, %v1184, %v1180
          %v1186 = vlaneseq
          %v1187 = vshrl.u32 %v1186, 7
          %v1188 = vsub.s32 %v1129, %v1187
          %v1189 = vrot.slane %v1070, %v1188
          %v1190 = vlaneseq
          %v1191 = vshrl.u32 %v1190, 7
          %v1192 = vsub.s32 %v1134, %v1191
          %v1193 = vrot.slane %v1073, %v1192
          %v1194 = vsel %vm1139, %v1193, %v1189
          %v1195 = vlaneseq
          %v1196 = vshrl.u32 %v1195, 7
          %v1197 = vsub.s32 %v1129, %v1196
          %v1198 = vrot.slane %v1076, %v1197
          %v1199 = vlaneseq
          %v1200 = vshrl.u32 %v1199, 7
          %v1201 = vsub.s32 %v1134, %v1200
          %v1202 = vrot.slane %v1079, %v1201
          %v1203 = vsel %vm1139, %v1202, %v1198
          %v1204 = vlaneseq
          %v1205 = vshrl.u32 %v1204, 7
          %v1206 = vsub.s32 %v1129, %v1205
          %v1207 = vrot.slane %v1082, %v1206
          %v1208 = vlaneseq
          %v1209 = vshrl.u32 %v1208, 7
          %v1210 = vsub.s32 %v1134, %v1209
          %v1211 = vrot.slane %v1085, %v1210
          %v1212 = vsel %vm1139, %v1211, %v1207
          %v1213 = vlaneseq
          %v1214 = vshrl.u32 %v1213, 7
          %v1215 = vsub.s32 %v1129, %v1214
          %v1216 = vrot.slane %v1088, %v1215
          %v1217 = vlaneseq
          %v1218 = vshrl.u32 %v1217, 7
          %v1219 = vsub.s32 %v1134, %v1218
          %v1220 = vrot.slane %v1091, %v1219
          %v1221 = vsel %vm1139, %v1220, %v1216
          %v1222 = vlaneseq
          %v1223 = vshrl.u32 %v1222, 7
          %v1224 = vsub.s32 %v1129, %v1223
          %v1225 = vrot.slane %v1094, %v1224
          %v1226 = vlaneseq
          %v1227 = vshrl.u32 %v1226, 7
          %v1228 = vsub.s32 %v1134, %v1227
          %v1229 = vrot.slane %v1097, %v1228
          %v1230 = vsel %vm1139, %v1229, %v1225
          %v1231 = vlaneseq
          %v1232 = vshrl.u32 %v1231, 7
          %v1233 = vsub.s32 %v1129, %v1232
          %v1234 = vrot.slane %v1100, %v1233
          %v1235 = vlaneseq
          %v1236 = vshrl.u32 %v1235, 7
          %v1237 = vsub.s32 %v1134, %v1236
          %v1238 = vrot.slane %v1103, %v1237
          %v1239 = vsel %vm1139, %v1238, %v1234
          %v1240 = vlaneseq
          %v1241 = vshrl.u32 %v1240, 7
          %v1242 = vsub.s32 %v1129, %v1241
          %v1243 = vrot.slane %v1106, %v1242
          %v1244 = vlaneseq
          %v1245 = vshrl.u32 %v1244, 7
          %v1246 = vsub.s32 %v1134, %v1245
          %v1247 = vrot.slane %v1109, %v1246
          %v1248 = vsel %vm1139, %v1247, %v1243
          %v1249 = vlaneseq
          %v1250 = vshrl.u32 %v1249, 7
          %v1251 = vsub.s32 %v1129, %v1250
          %v1252 = vrot.slane %v1112, %v1251
          %v1253 = vlaneseq
          %v1254 = vshrl.u32 %v1253, 7
          %v1255 = vsub.s32 %v1134, %v1254
          %v1256 = vrot.slane %v1115, %v1255
          %v1257 = vsel %vm1139, %v1256, %v1252
          %v1258 = vlaneseq
          %v1259 = vshrl.u32 %v1258, 7
          %v1260 = vsub.s32 %v1129, %v1259
          %v1261 = vrot.slane %v1118, %v1260
          %v1262 = vlaneseq
          %v1263 = vshrl.u32 %v1262, 7
          %v1264 = vsub.s32 %v1134, %v1263
          %v1265 = vrot.slane %v1121, %v1264
          %v1266 = vsel %vm1139, %v1265, %v1261
          %v1267 = vlaneseq
          %v1268 = vshrl.u32 %v1267, 7
          %v1269 = vsub.s32 %v1129, %v1268
          %v1270 = vrot.slane %v1124, %v1269
          %v1271 = vlaneseq
          %v1272 = vshrl.u32 %v1271, 7
          %v1273 = vsub.s32 %v1134, %v1272
          %v1274 = vrot.slane %v1127, %v1273
          %v1275 = vsel %vm1139, %v1274, %v1270
          %vm1276 = vcmask 1041409
          %v1277 = vsel %vm1276, %v1149, %v1140
          %vm1278 = vcmask 1042434
          %v1279 = vsel %vm1278, %v1158, %v1277
          %vm1280 = vcmask 1043459
          %v1281 = vsel %vm1280, %v1167, %v1279
          %vm1282 = vcmask 1044484
          %v1283 = vsel %vm1282, %v1176, %v1281
          %vm1284 = vcmask 1045509
          %v1285 = vsel %vm1284, %v1185, %v1283
          %vm1286 = vcmask 1046534
          %v1287 = vsel %vm1286, %v1194, %v1285
          %vm1288 = vcmask 1047559
          %v1289 = vsel %vm1288, %v1203, %v1287
          %v1290 = vsel %vm1276, %v1221, %v1212
          %v1291 = vsel %vm1278, %v1230, %v1290
          %v1292 = vsel %vm1280, %v1239, %v1291
          %v1293 = vsel %vm1282, %v1248, %v1292
          %v1294 = vsel %vm1284, %v1257, %v1293
          %v1295 = vsel %vm1286, %v1266, %v1294
          %v1296 = vsel %vm1288, %v1275, %v1295
          %s1299 = smul.u32 %s29, 16
          %s1300 = scalar_lea.vmem [#allocation2], %s1299
          %vm1301 = vcmask 130048
          %1302 = vst.msk [vmem:[%s1300] sm:$0xff] %vm1301, %v1289
          %1303 = vst.msk [vmem:[%s1300 + $0x8] sm:$0xff] %vm1301, %v1296
          %v1304 = vld [vmem:[%s4] sm:$0xff]
          %v1305 = vld [vmem:[%s4 + $0x8] sm:$0xff]
          %v1306 = vld [vmem:[%s5] sm:$0x1]
          %v1308 = vlaneseq
          %v1309 = vshrl.u32 %v1308, 7
          %v1310 = vsub.s32 0, %v1309
          %v1311 = vrot.slane %v1306, %v1310
          %v1314 = vsel %vm1301, %v548, 0
          %v1317 = vsel %vm1301, %v549, 0
          %1319 = vmatprep.subr.mxu0 0.0
          %1320 = vmatpush1.msra.mxu0 %v1304
          %1321 = vmatprep.subr.mxu0 0.0
          %1322 = vmatpush1.msra.mxu0 %v1305
          %1323 = vmatprep.subr.mxu0 0.0
          %1324 = vmatpush1.msra.mxu0 0.0
          %1325 = vmatprep.subr.mxu0 0.0
          %1326 = vmatpush1.msra.mxu0 0.0
          %1327 = vmatprep.subr.mxu0 0.0
          %1328 = vmatpush1.msra.mxu0 0.0
          %1329 = vmatprep.subr.mxu0 0.0
          %1330 = vmatpush1.msra.mxu0 0.0
          %1331 = vmatprep.subr.mxu0 0.0
          %1332 = vmatpush1.msra.mxu0 0.0
          %1333 = vmatprep.subr.mxu0 0.0
          %1334 = vmatpush1.msra.mxu0 0.0
          %1335 = vmatprep.subr.mxu0 0.0
          %1336 = vmatpush1.msra.mxu0 0.0
          %1337 = vmatprep.subr.mxu0 0.0
          %1338 = vmatpush1.msra.mxu0 0.0
          %1339 = vmatprep.subr.mxu0 0.0
          %1340 = vmatpush1.msra.mxu0 0.0
          %1341 = vmatprep.subr.mxu0 0.0
          %1342 = vmatpush1.msra.mxu0 0.0
          %1343 = vmatprep.subr.mxu0 0.0
          %1344 = vmatpush1.msra.mxu0 0.0
          %1345 = vmatprep.subr.mxu0 0.0
          %1346 = vmatpush1.msra.mxu0 0.0
          %1347 = vmatprep.subr.mxu0 0.0
          %1348 = vmatpush1.msra.mxu0 0.0
          %1349 = vmatprep.subr.mxu0 0.0
          %1350 = vmatpush1.msra.mxu0 0.0
          %1351 = vmatprep.subr.mxu0 0.0
          %1352 = vmatpush1.msra.mxu0 0.0
          %1353 = vmatprep.subr.mxu0 0.0
          %1354 = vmatpush1.msra.mxu0 0.0
          %1355 = vmatprep.subr.mxu0 0.0
          %1356 = vmatpush1.msra.mxu0 0.0
          %1357 = vmatprep.subr.mxu0 0.0
          %1358 = vmatpush1.msra.mxu0 0.0
          %1359 = vmatprep.subr.mxu0 0.0
          %1360 = vmatpush1.msra.mxu0 0.0
          %1361 = vmatprep.subr.mxu0 0.0
          %1362 = vmatpush1.msra.mxu0 0.0
          %1363 = vmatprep.subr.mxu0 0.0
          %1364 = vmatpush1.msra.mxu0 0.0
          %1365 = vmatprep.subr.mxu0 0.0
          %1366 = vmatpush1.msra.mxu0 0.0
          %1367 = vmatprep.subr.mxu0 0.0
          %1368 = vmatpush1.msra.mxu0 0.0
          %1369 = vmatprep.subr.mxu0 0.0
          %1370 = vmatpush1.msra.mxu0 0.0
          %1371 = vmatprep.subr.mxu0 0.0
          %1372 = vmatpush1.msra.mxu0 0.0
          %1373 = vmatprep.subr.mxu0 0.0
          %1374 = vmatpush1.msra.mxu0 0.0
          %1375 = vmatprep.subr.mxu0 0.0
          %1376 = vmatpush1.msra.mxu0 0.0
          %1377 = vmatprep.subr.mxu0 0.0
          %1378 = vmatpush1.msra.mxu0 0.0
          %1379 = vmatprep.subr.mxu0 0.0
          %1380 = vmatpush1.msra.mxu0 0.0
          %1381 = vmatprep.subr.mxu0 0.0
          %1382 = vmatpush1.msra.mxu0 0.0
          %1383 = vmatprep.mubr.f32.mxu0 0.0
          %1384 = vmatmul.mubr.f32.gmra.mrb[0].mxu0 %v1314
          %v1385 = vpop.f32.mrb[0].mxu0
          %v1386 = vadd.f32 %v1311, %v1385
          %v1387 = vpop.f32.mrb[0].mxu0
          %1388 = vmatprep.mubr.f32.mxu0 0.0
          %1389 = vmatmul.mubr.f32.gmra.mrb[0].mxu0 %v1317
          %v1390 = vpop.f32.mrb[0].mxu0
          %v1391 = vadd.f32 %v1311, %v1390
          %v1392 = vpop.f32.mrb[0].mxu0
          %1393 = vdwg.mxu0
          %v1394 = vld [vmem:[%s3] sm:$0x1]
          %v1395 = vlaneseq
          %v1396 = vshrl.u32 %v1395, 7
          %v1397 = vsub.s32 0, %v1396
          %v1398 = vrot.slane %v1394, %v1397
          %v1399 = vmul.f32 %v584, %v1398
          %v1400 = vmul.f32 %v585, %v1398
          %v1401 = vmul.f32 %v586, %v1398
          %v1402 = vmul.f32 %v587, %v1398
          %v1403 = vmul.f32 %v588, %v1398
          %v1404 = vmul.f32 %v589, %v1398
          %v1405 = vmul.f32 %v590, %v1398
          %v1406 = vmul.f32 %v591, %v1398
          %v1407 = vmul.f32 %v592, %v1398
          %v1408 = vmul.f32 %v593, %v1398
          %v1409 = vmul.f32 %v594, %v1398
          %v1410 = vmul.f32 %v595, %v1398
          %v1411 = vmul.f32 %v596, %v1398
          %v1412 = vmul.f32 %v597, %v1398
          %v1413 = vmul.f32 %v598, %v1398
          %v1414 = vmul.f32 %v599, %v1398
          %v1415 = vmul.f32 %v600, %v1398
          %v1416 = vmul.f32 %v601, %v1398
          %v1417 = vmul.f32 %v602, %v1398
          %v1418 = vmul.f32 %v603, %v1398
          %v1419 = vmul.f32 %v604, %v1398
          %v1420 = vmul.f32 %v605, %v1398
          %v1421 = vmul.f32 %v606, %v1398
          %v1422 = vmul.f32 %v607, %v1398
          %v1423 = vmul.f32 %v608, %v1398
          %v1424 = vmul.f32 %v609, %v1398
          %v1425 = vmul.f32 %v610, %v1398
          %v1426 = vmul.f32 %v611, %v1398
          %v1427 = vmul.f32 %v612, %v1398
          %v1428 = vmul.f32 %v613, %v1398
          %v1429 = vmul.f32 %v614, %v1398
          %v1430 = vmul.f32 %v615, %v1398
          %v1431 = vsel %vm653, %v1399, 0.0
          %1432 = vadd.xlane.f32.xlu0 %v1431
          %v1433 = vpop.xlane.xlu0 %1432
          %v1434 = vsel %vm653, %v1400, 0.0
          %1435 = vadd.xlane.f32.xlu0 %v1434
          %v1436 = vpop.xlane.xlu0 %1435
          %v1437 = vsel %vm653, %v1401, 0.0
          %1438 = vadd.xlane.f32.xlu0 %v1437
          %v1439 = vpop.xlane.xlu0 %1438
          %v1440 = vsel %vm653, %v1402, 0.0
          %1441 = vadd.xlane.f32.xlu0 %v1440
          %v1442 = vpop.xlane.xlu0 %1441
          %v1443 = vsel %vm653, %v1403, 0.0
          %1444 = vadd.xlane.f32.xlu0 %v1443
          %v1445 = vpop.xlane.xlu0 %1444
          %v1446 = vsel %vm653, %v1404, 0.0
          %1447 = vadd.xlane.f32.xlu0 %v1446
          %v1448 = vpop.xlane.xlu0 %1447
          %v1449 = vsel %vm653, %v1405, 0.0
          %1450 = vadd.xlane.f32.xlu0 %v1449
          %v1451 = vpop.xlane.xlu0 %1450
          %v1452 = vsel %vm653, %v1406, 0.0
          %1453 = vadd.xlane.f32.xlu0 %v1452
          %v1454 = vpop.xlane.xlu0 %1453
          %v1455 = vsel %vm653, %v1407, 0.0
          %1456 = vadd.xlane.f32.xlu0 %v1455
          %v1457 = vpop.xlane.xlu0 %1456
          %v1458 = vsel %vm653, %v1408, 0.0
          %1459 = vadd.xlane.f32.xlu0 %v1458
          %v1460 = vpop.xlane.xlu0 %1459
          %v1461 = vsel %vm653, %v1409, 0.0
          %1462 = vadd.xlane.f32.xlu0 %v1461
          %v1463 = vpop.xlane.xlu0 %1462
          %v1464 = vsel %vm653, %v1410, 0.0
          %1465 = vadd.xlane.f32.xlu0 %v1464
          %v1466 = vpop.xlane.xlu0 %1465
          %v1467 = vsel %vm653, %v1411, 0.0
          %1468 = vadd.xlane.f32.xlu0 %v1467
          %v1469 = vpop.xlane.xlu0 %1468
          %v1470 = vsel %vm653, %v1412, 0.0
          %1471 = vadd.xlane.f32.xlu0 %v1470
          %v1472 = vpop.xlane.xlu0 %1471
          %v1473 = vsel %vm653, %v1413, 0.0
          %1474 = vadd.xlane.f32.xlu0 %v1473
          %v1475 = vpop.xlane.xlu0 %1474
          %v1476 = vsel %vm653, %v1414, 0.0
          %1477 = vadd.xlane.f32.xlu0 %v1476
          %v1478 = vpop.xlane.xlu0 %1477
          %v1479 = vsel %vm653, %v1415, 0.0
          %1480 = vadd.xlane.f32.xlu0 %v1479
          %v1481 = vpop.xlane.xlu0 %1480
          %v1482 = vsel %vm653, %v1416, 0.0
          %1483 = vadd.xlane.f32.xlu0 %v1482
          %v1484 = vpop.xlane.xlu0 %1483
          %v1485 = vsel %vm653, %v1417, 0.0
          %1486 = vadd.xlane.f32.xlu0 %v1485
          %v1487 = vpop.xlane.xlu0 %1486
          %v1488 = vsel %vm653, %v1418, 0.0
          %1489 = vadd.xlane.f32.xlu0 %v1488
          %v1490 = vpop.xlane.xlu0 %1489
          %v1491 = vsel %vm653, %v1419, 0.0
          %1492 = vadd.xlane.f32.xlu0 %v1491
          %v1493 = vpop.xlane.xlu0 %1492
          %v1494 = vsel %vm653, %v1420, 0.0
          %1495 = vadd.xlane.f32.xlu0 %v1494
          %v1496 = vpop.xlane.xlu0 %1495
          %v1497 = vsel %vm653, %v1421, 0.0
          %1498 = vadd.xlane.f32.xlu0 %v1497
          %v1499 = vpop.xlane.xlu0 %1498
          %v1500 = vsel %vm653, %v1422, 0.0
          %1501 = vadd.xlane.f32.xlu0 %v1500
          %v1502 = vpop.xlane.xlu0 %1501
          %v1503 = vsel %vm653, %v1423, 0.0
          %1504 = vadd.xlane.f32.xlu0 %v1503
          %v1505 = vpop.xlane.xlu0 %1504
          %v1506 = vsel %vm653, %v1424, 0.0
          %1507 = vadd.xlane.f32.xlu0 %v1506
          %v1508 = vpop.xlane.xlu0 %1507
          %v1509 = vsel %vm653, %v1425, 0.0
          %1510 = vadd.xlane.f32.xlu0 %v1509
          %v1511 = vpop.xlane.xlu0 %1510
          %v1512 = vsel %vm653, %v1426, 0.0
          %1513 = vadd.xlane.f32.xlu0 %v1512
          %v1514 = vpop.xlane.xlu0 %1513
          %v1515 = vsel %vm653, %v1427, 0.0
          %1516 = vadd.xlane.f32.xlu0 %v1515
          %v1517 = vpop.xlane.xlu0 %1516
          %v1518 = vsel %vm653, %v1428, 0.0
          %1519 = vadd.xlane.f32.xlu0 %v1518
          %v1520 = vpop.xlane.xlu0 %1519
          %v1521 = vsel %vm653, %v1429, 0.0
          %1522 = vadd.xlane.f32.xlu0 %v1521
          %v1523 = vpop.xlane.xlu0 %1522
          %v1524 = vsel %vm653, %v1430, 0.0
          %1525 = vadd.xlane.f32.xlu0 %v1524
          %v1526 = vpop.xlane.xlu0 %1525
          %1528 = vrot.lane.b32.xlu0 %v1394, 64
          %v1529 = vpop.permute.xlu0 %1528
          %s1530 = vtos %v1529
          %v1531 = vstv %s1530
          %v1533 = vmul.f32 %v550, %v1531
          %v1534 = vmul.f32 %v551, %v1531
          %v1537 = vlaneseq
          %v1538 = vshrl.u32 %v1537, 7
          %v1539 = vsub.s32 0, %v1538
          %v1540 = vrot.slane %v1533, %v1539
          %1542 = vbcast.lane.b32.xlu0 %v1540, 256
          %v1543 = vpop.permute.xlu0 %1542
          %s1545 = sor.u32 256, 8
          %1546 = vbcast.lane.b32.xlu0 %v1540, %s1545
          %v1547 = vpop.permute.xlu0 %1546
          %v1548 = vlaneseq
          %v1549 = vshrl.u32 %v1548, 7
          %v1550 = vsub.s32 1, %v1549
          %v1551 = vrot.slane %v1533, %v1550
          %1553 = vbcast.lane.b32.xlu0 %v1551, 256
          %v1554 = vpop.permute.xlu0 %1553
          %s1556 = sor.u32 256, 8
          %1557 = vbcast.lane.b32.xlu0 %v1551, %s1556
          %v1558 = vpop.permute.xlu0 %1557
          %v1559 = vlaneseq
          %v1560 = vshrl.u32 %v1559, 7
          %v1561 = vsub.s32 2, %v1560
          %v1562 = vrot.slane %v1533, %v1561
          %1564 = vbcast.lane.b32.xlu0 %v1562, 256
          %v1565 = vpop.permute.xlu0 %1564
          %s1567 = sor.u32 256, 8
          %1568 = vbcast.lane.b32.xlu0 %v1562, %s1567
          %v1569 = vpop.permute.xlu0 %1568
          %v1570 = vlaneseq
          %v1571 = vshrl.u32 %v1570, 7
          %v1572 = vsub.s32 3, %v1571
          %v1573 = vrot.slane %v1533, %v1572
          %1575 = vbcast.lane.b32.xlu0 %v1573, 256
          %v1576 = vpop.permute.xlu0 %1575
          %s1578 = sor.u32 256, 8
          %1579 = vbcast.lane.b32.xlu0 %v1573, %s1578
          %v1580 = vpop.permute.xlu0 %1579
          %v1581 = vlaneseq
          %v1582 = vshrl.u32 %v1581, 7
          %v1583 = vsub.s32 4, %v1582
          %v1584 = vrot.slane %v1533, %v1583
          %1586 = vbcast.lane.b32.xlu0 %v1584, 256
          %v1587 = vpop.permute.xlu0 %1586
          %s1589 = sor.u32 256, 8
          %1590 = vbcast.lane.b32.xlu0 %v1584, %s1589
          %v1591 = vpop.permute.xlu0 %1590
          %v1592 = vlaneseq
          %v1593 = vshrl.u32 %v1592, 7
          %v1594 = vsub.s32 5, %v1593
          %v1595 = vrot.slane %v1533, %v1594
          %1597 = vbcast.lane.b32.xlu0 %v1595, 256
          %v1598 = vpop.permute.xlu0 %1597
          %s1600 = sor.u32 256, 8
          %1601 = vbcast.lane.b32.xlu0 %v1595, %s1600
          %v1602 = vpop.permute.xlu0 %1601
          %v1603 = vlaneseq
          %v1604 = vshrl.u32 %v1603, 7
          %v1605 = vsub.s32 6, %v1604
          %v1606 = vrot.slane %v1533, %v1605
          %1608 = vbcast.lane.b32.xlu0 %v1606, 256
          %v1609 = vpop.permute.xlu0 %1608
          %s1611 = sor.u32 256, 8
          %1612 = vbcast.lane.b32.xlu0 %v1606, %s1611
          %v1613 = vpop.permute.xlu0 %1612
          %v1614 = vlaneseq
          %v1615 = vshrl.u32 %v1614, 7
          %v1616 = vsub.s32 7, %v1615
          %v1617 = vrot.slane %v1533, %v1616
          %1619 = vbcast.lane.b32.xlu0 %v1617, 256
          %v1620 = vpop.permute.xlu0 %1619
          %s1622 = sor.u32 256, 8
          %1623 = vbcast.lane.b32.xlu0 %v1617, %s1622
          %v1624 = vpop.permute.xlu0 %1623
          %v1625 = vlaneseq
          %v1626 = vshrl.u32 %v1625, 7
          %v1627 = vsub.s32 0, %v1626
          %v1628 = vrot.slane %v1534, %v1627
          %1630 = vbcast.lane.b32.xlu0 %v1628, 256
          %v1631 = vpop.permute.xlu0 %1630
          %s1633 = sor.u32 256, 8
          %1634 = vbcast.lane.b32.xlu0 %v1628, %s1633
          %v1635 = vpop.permute.xlu0 %1634
          %v1636 = vlaneseq
          %v1637 = vshrl.u32 %v1636, 7
          %v1638 = vsub.s32 1, %v1637
          %v1639 = vrot.slane %v1534, %v1638
          %1641 = vbcast.lane.b32.xlu0 %v1639, 256
          %v1642 = vpop.permute.xlu0 %1641
          %s1644 = sor.u32 256, 8
          %1645 = vbcast.lane.b32.xlu0 %v1639, %s1644
          %v1646 = vpop.permute.xlu0 %1645
          %v1647 = vlaneseq
          %v1648 = vshrl.u32 %v1647, 7
          %v1649 = vsub.s32 2, %v1648
          %v1650 = vrot.slane %v1534, %v1649
          %1652 = vbcast.lane.b32.xlu0 %v1650, 256
          %v1653 = vpop.permute.xlu0 %1652
          %s1655 = sor.u32 256, 8
          %1656 = vbcast.lane.b32.xlu0 %v1650, %s1655
          %v1657 = vpop.permute.xlu0 %1656
          %v1658 = vlaneseq
          %v1659 = vshrl.u32 %v1658, 7
          %v1660 = vsub.s32 3, %v1659
          %v1661 = vrot.slane %v1534, %v1660
          %1663 = vbcast.lane.b32.xlu0 %v1661, 256
          %v1664 = vpop.permute.xlu0 %1663
          %s1666 = sor.u32 256, 8
          %1667 = vbcast.lane.b32.xlu0 %v1661, %s1666
          %v1668 = vpop.permute.xlu0 %1667
          %v1669 = vlaneseq
          %v1670 = vshrl.u32 %v1669, 7
          %v1671 = vsub.s32 4, %v1670
          %v1672 = vrot.slane %v1534, %v1671
          %1674 = vbcast.lane.b32.xlu0 %v1672, 256
          %v1675 = vpop.permute.xlu0 %1674
          %s1677 = sor.u32 256, 8
          %1678 = vbcast.lane.b32.xlu0 %v1672, %s1677
          %v1679 = vpop.permute.xlu0 %1678
          %v1680 = vlaneseq
          %v1681 = vshrl.u32 %v1680, 7
          %v1682 = vsub.s32 5, %v1681
          %v1683 = vrot.slane %v1534, %v1682
          %1685 = vbcast.lane.b32.xlu0 %v1683, 256
          %v1686 = vpop.permute.xlu0 %1685
          %s1688 = sor.u32 256, 8
          %1689 = vbcast.lane.b32.xlu0 %v1683, %s1688
          %v1690 = vpop.permute.xlu0 %1689
          %v1691 = vlaneseq
          %v1692 = vshrl.u32 %v1691, 7
          %v1693 = vsub.s32 6, %v1692
          %v1694 = vrot.slane %v1534, %v1693
          %1696 = vbcast.lane.b32.xlu0 %v1694, 256
          %v1697 = vpop.permute.xlu0 %1696
          %s1699 = sor.u32 256, 8
          %1700 = vbcast.lane.b32.xlu0 %v1694, %s1699
          %v1701 = vpop.permute.xlu0 %1700
          %v1702 = vlaneseq
          %v1703 = vshrl.u32 %v1702, 7
          %v1704 = vsub.s32 7, %v1703
          %v1705 = vrot.slane %v1534, %v1704
          %1707 = vbcast.lane.b32.xlu0 %v1705, 256
          %v1708 = vpop.permute.xlu0 %1707
          %s1710 = sor.u32 256, 8
          %1711 = vbcast.lane.b32.xlu0 %v1705, %s1710
          %v1712 = vpop.permute.xlu0 %1711
          %v1745 = vadd.f32 %v1433, %v1543
          %v1746 = vadd.f32 %v1436, %v1547
          %v1747 = vadd.f32 %v1439, %v1554
          %v1748 = vadd.f32 %v1442, %v1558
          %v1749 = vadd.f32 %v1445, %v1565
          %v1750 = vadd.f32 %v1448, %v1569
          %v1751 = vadd.f32 %v1451, %v1576
          %v1752 = vadd.f32 %v1454, %v1580
          %v1753 = vadd.f32 %v1457, %v1587
          %v1754 = vadd.f32 %v1460, %v1591
          %v1755 = vadd.f32 %v1463, %v1598
          %v1756 = vadd.f32 %v1466, %v1602
          %v1757 = vadd.f32 %v1469, %v1609
          %v1758 = vadd.f32 %v1472, %v1613
          %v1759 = vadd.f32 %v1475, %v1620
          %v1760 = vadd.f32 %v1478, %v1624
          %v1761 = vadd.f32 %v1481, %v1631
          %v1762 = vadd.f32 %v1484, %v1635
          %v1763 = vadd.f32 %v1487, %v1642
          %v1764 = vadd.f32 %v1490, %v1646
          %v1765 = vadd.f32 %v1493, %v1653
          %v1766 = vadd.f32 %v1496, %v1657
          %v1767 = vadd.f32 %v1499, %v1664
          %v1768 = vadd.f32 %v1502, %v1668
          %v1769 = vadd.f32 %v1505, %v1675
          %v1770 = vadd.f32 %v1508, %v1679
          %v1771 = vadd.f32 %v1511, %v1686
          %v1772 = vadd.f32 %v1514, %v1690
          %v1773 = vadd.f32 %v1517, %v1697
          %v1774 = vadd.f32 %v1520, %v1701
          %v1775 = vadd.f32 %v1523, %v1708
          %v1776 = vadd.f32 %v1526, %v1712
          %1809 = vset.pattern.permute.xlu0 0
          %1810 = vperm.xlu0 %1809, %v1745
          %v1811 = vpop.permute.xlu0 %1810
          %1812 = vset.pattern.permute.xlu0 0
          %1813 = vperm.xlu0 %1812, %v1746
          %v1814 = vpop.permute.xlu0 %1813
          %1815 = vset.pattern.permute.xlu0 0
          %1816 = vperm.xlu0 %1815, %v1747
          %v1817 = vpop.permute.xlu0 %1816
          %1818 = vset.pattern.permute.xlu0 0
          %1819 = vperm.xlu0 %1818, %v1748
          %v1820 = vpop.permute.xlu0 %1819
          %1821 = vset.pattern.permute.xlu0 0
          %1822 = vperm.xlu0 %1821, %v1749
          %v1823 = vpop.permute.xlu0 %1822
          %1824 = vset.pattern.permute.xlu0 0
          %1825 = vperm.xlu0 %1824, %v1750
          %v1826 = vpop.permute.xlu0 %1825
          %1827 = vset.pattern.permute.xlu0 0
          %1828 = vperm.xlu0 %1827, %v1751
          %v1829 = vpop.permute.xlu0 %1828
          %1830 = vset.pattern.permute.xlu0 0
          %1831 = vperm.xlu0 %1830, %v1752
          %v1832 = vpop.permute.xlu0 %1831
          %1833 = vset.pattern.permute.xlu0 0
          %1834 = vperm.xlu0 %1833, %v1753
          %v1835 = vpop.permute.xlu0 %1834
          %1836 = vset.pattern.permute.xlu0 0
          %1837 = vperm.xlu0 %1836, %v1754
          %v1838 = vpop.permute.xlu0 %1837
          %1839 = vset.pattern.permute.xlu0 0
          %1840 = vperm.xlu0 %1839, %v1755
          %v1841 = vpop.permute.xlu0 %1840
          %1842 = vset.pattern.permute.xlu0 0
          %1843 = vperm.xlu0 %1842, %v1756
          %v1844 = vpop.permute.xlu0 %1843
          %1845 = vset.pattern.permute.xlu0 0
          %1846 = vperm.xlu0 %1845, %v1757
          %v1847 = vpop.permute.xlu0 %1846
          %1848 = vset.pattern.permute.xlu0 0
          %1849 = vperm.xlu0 %1848, %v1758
          %v1850 = vpop.permute.xlu0 %1849
          %1851 = vset.pattern.permute.xlu0 0
          %1852 = vperm.xlu0 %1851, %v1759
          %v1853 = vpop.permute.xlu0 %1852
          %1854 = vset.pattern.permute.xlu0 0
          %1855 = vperm.xlu0 %1854, %v1760
          %v1856 = vpop.permute.xlu0 %1855
          %1857 = vset.pattern.permute.xlu0 0
          %1858 = vperm.xlu0 %1857, %v1761
          %v1859 = vpop.permute.xlu0 %1858
          %1860 = vset.pattern.permute.xlu0 0
          %1861 = vperm.xlu0 %1860, %v1762
          %v1862 = vpop.permute.xlu0 %1861
          %1863 = vset.pattern.permute.xlu0 0
          %1864 = vperm.xlu0 %1863, %v1763
          %v1865 = vpop.permute.xlu0 %1864
          %1866 = vset.pattern.permute.xlu0 0
          %1867 = vperm.xlu0 %1866, %v1764
          %v1868 = vpop.permute.xlu0 %1867
          %1869 = vset.pattern.permute.xlu0 0
          %1870 = vperm.xlu0 %1869, %v1765
          %v1871 = vpop.permute.xlu0 %1870
          %1872 = vset.pattern.permute.xlu0 0
          %1873 = vperm.xlu0 %1872, %v1766
          %v1874 = vpop.permute.xlu0 %1873
          %1875 = vset.pattern.permute.xlu0 0
          %1876 = vperm.xlu0 %1875, %v1767
          %v1877 = vpop.permute.xlu0 %1876
          %1878 = vset.pattern.permute.xlu0 0
          %1879 = vperm.xlu0 %1878, %v1768
          %v1880 = vpop.permute.xlu0 %1879
          %1881 = vset.pattern.permute.xlu0 0
          %1882 = vperm.xlu0 %1881, %v1769
          %v1883 = vpop.permute.xlu0 %1882
          %1884 = vset.pattern.permute.xlu0 0
          %1885 = vperm.xlu0 %1884, %v1770
          %v1886 = vpop.permute.xlu0 %1885
          %1887 = vset.pattern.permute.xlu0 0
          %1888 = vperm.xlu0 %1887, %v1771
          %v1889 = vpop.permute.xlu0 %1888
          %1890 = vset.pattern.permute.xlu0 0
          %1891 = vperm.xlu0 %1890, %v1772
          %v1892 = vpop.permute.xlu0 %1891
          %1893 = vset.pattern.permute.xlu0 0
          %1894 = vperm.xlu0 %1893, %v1773
          %v1895 = vpop.permute.xlu0 %1894
          %1896 = vset.pattern.permute.xlu0 0
          %1897 = vperm.xlu0 %1896, %v1774
          %v1898 = vpop.permute.xlu0 %1897
          %1899 = vset.pattern.permute.xlu0 0
          %1900 = vperm.xlu0 %1899, %v1775
          %v1901 = vpop.permute.xlu0 %1900
          %1902 = vset.pattern.permute.xlu0 0
          %1903 = vperm.xlu0 %1902, %v1776
          %v1904 = vpop.permute.xlu0 %1903
          %v1905 = vlaneseq
          %v1906 = vshrl.u32 %v1905, 7
          %v1907 = vsub.s32 %v1129, %v1906
          %v1908 = vrot.slane %v1811, %v1907
          %v1909 = vlaneseq
          %v1910 = vshrl.u32 %v1909, 7
          %v1911 = vsub.s32 %v1134, %v1910
          %v1912 = vrot.slane %v1814, %v1911
          %v1913 = vsel %vm1139, %v1912, %v1908
          %v1914 = vlaneseq
          %v1915 = vshrl.u32 %v1914, 7
          %v1916 = vsub.s32 %v1129, %v1915
          %v1917 = vrot.slane %v1817, %v1916
          %v1918 = vlaneseq
          %v1919 = vshrl.u32 %v1918, 7
          %v1920 = vsub.s32 %v1134, %v1919
          %v1921 = vrot.slane %v1820, %v1920
          %v1922 = vsel %vm1139, %v1921, %v1917
          %v1923 = vlaneseq
          %v1924 = vshrl.u32 %v1923, 7
          %v1925 = vsub.s32 %v1129, %v1924
          %v1926 = vrot.slane %v1823, %v1925
          %v1927 = vlaneseq
          %v1928 = vshrl.u32 %v1927, 7
          %v1929 = vsub.s32 %v1134, %v1928
          %v1930 = vrot.slane %v1826, %v1929
          %v1931 = vsel %vm1139, %v1930, %v1926
          %v1932 = vlaneseq
          %v1933 = vshrl.u32 %v1932, 7
          %v1934 = vsub.s32 %v1129, %v1933
          %v1935 = vrot.slane %v1829, %v1934
          %v1936 = vlaneseq
          %v1937 = vshrl.u32 %v1936, 7
          %v1938 = vsub.s32 %v1134, %v1937
          %v1939 = vrot.slane %v1832, %v1938
          %v1940 = vsel %vm1139, %v1939, %v1935
          %v1941 = vlaneseq
          %v1942 = vshrl.u32 %v1941, 7
          %v1943 = vsub.s32 %v1129, %v1942
          %v1944 = vrot.slane %v1835, %v1943
          %v1945 = vlaneseq
          %v1946 = vshrl.u32 %v1945, 7
          %v1947 = vsub.s32 %v1134, %v1946
          %v1948 = vrot.slane %v1838, %v1947
          %v1949 = vsel %vm1139, %v1948, %v1944
          %v1950 = vlaneseq
          %v1951 = vshrl.u32 %v1950, 7
          %v1952 = vsub.s32 %v1129, %v1951
          %v1953 = vrot.slane %v1841, %v1952
          %v1954 = vlaneseq
          %v1955 = vshrl.u32 %v1954, 7
          %v1956 = vsub.s32 %v1134, %v1955
          %v1957 = vrot.slane %v1844, %v1956
          %v1958 = vsel %vm1139, %v1957, %v1953
          %v1959 = vlaneseq
          %v1960 = vshrl.u32 %v1959, 7
          %v1961 = vsub.s32 %v1129, %v1960
          %v1962 = vrot.slane %v1847, %v1961
          %v1963 = vlaneseq
          %v1964 = vshrl.u32 %v1963, 7
          %v1965 = vsub.s32 %v1134, %v1964
          %v1966 = vrot.slane %v1850, %v1965
          %v1967 = vsel %vm1139, %v1966, %v1962
          %v1968 = vlaneseq
          %v1969 = vshrl.u32 %v1968, 7
          %v1970 = vsub.s32 %v1129, %v1969
          %v1971 = vrot.slane %v1853, %v1970
          %v1972 = vlaneseq
          %v1973 = vshrl.u32 %v1972, 7
          %v1974 = vsub.s32 %v1134, %v1973
          %v1975 = vrot.slane %v1856, %v1974
          %v1976 = vsel %vm1139, %v1975, %v1971
          %v1977 = vlaneseq
          %v1978 = vshrl.u32 %v1977, 7
          %v1979 = vsub.s32 %v1129, %v1978
          %v1980 = vrot.slane %v1859, %v1979
          %v1981 = vlaneseq
          %v1982 = vshrl.u32 %v1981, 7
          %v1983 = vsub.s32 %v1134, %v1982
          %v1984 = vrot.slane %v1862, %v1983
          %v1985 = vsel %vm1139, %v1984, %v1980
          %v1986 = vlaneseq
          %v1987 = vshrl.u32 %v1986, 7
          %v1988 = vsub.s32 %v1129, %v1987
          %v1989 = vrot.slane %v1865, %v1988
          %v1990 = vlaneseq
          %v1991 = vshrl.u32 %v1990, 7
          %v1992 = vsub.s32 %v1134, %v1991
          %v1993 = vrot.slane %v1868, %v1992
          %v1994 = vsel %vm1139, %v1993, %v1989
          %v1995 = vlaneseq
          %v1996 = vshrl.u32 %v1995, 7
          %v1997 = vsub.s32 %v1129, %v1996
          %v1998 = vrot.slane %v1871, %v1997
          %v1999 = vlaneseq
          %v2000 = vshrl.u32 %v1999, 7
          %v2001 = vsub.s32 %v1134, %v2000
          %v2002 = vrot.slane %v1874, %v2001
          %v2003 = vsel %vm1139, %v2002, %v1998
          %v2004 = vlaneseq
          %v2005 = vshrl.u32 %v2004, 7
          %v2006 = vsub.s32 %v1129, %v2005
          %v2007 = vrot.slane %v1877, %v2006
          %v2008 = vlaneseq
          %v2009 = vshrl.u32 %v2008, 7
          %v2010 = vsub.s32 %v1134, %v2009
          %v2011 = vrot.slane %v1880, %v2010
          %v2012 = vsel %vm1139, %v2011, %v2007
          %v2013 = vlaneseq
          %v2014 = vshrl.u32 %v2013, 7
          %v2015 = vsub.s32 %v1129, %v2014
          %v2016 = vrot.slane %v1883, %v2015
          %v2017 = vlaneseq
          %v2018 = vshrl.u32 %v2017, 7
          %v2019 = vsub.s32 %v1134, %v2018
          %v2020 = vrot.slane %v1886, %v2019
          %v2021 = vsel %vm1139, %v2020, %v2016
          %v2022 = vlaneseq
          %v2023 = vshrl.u32 %v2022, 7
          %v2024 = vsub.s32 %v1129, %v2023
          %v2025 = vrot.slane %v1889, %v2024
          %v2026 = vlaneseq
          %v2027 = vshrl.u32 %v2026, 7
          %v2028 = vsub.s32 %v1134, %v2027
          %v2029 = vrot.slane %v1892, %v2028
          %v2030 = vsel %vm1139, %v2029, %v2025
          %v2031 = vlaneseq
          %v2032 = vshrl.u32 %v2031, 7
          %v2033 = vsub.s32 %v1129, %v2032
          %v2034 = vrot.slane %v1895, %v2033
          %v2035 = vlaneseq
          %v2036 = vshrl.u32 %v2035, 7
          %v2037 = vsub.s32 %v1134, %v2036
          %v2038 = vrot.slane %v1898, %v2037
          %v2039 = vsel %vm1139, %v2038, %v2034
          %v2040 = vlaneseq
          %v2041 = vshrl.u32 %v2040, 7
          %v2042 = vsub.s32 %v1129, %v2041
          %v2043 = vrot.slane %v1901, %v2042
          %v2044 = vlaneseq
          %v2045 = vshrl.u32 %v2044, 7
          %v2046 = vsub.s32 %v1134, %v2045
          %v2047 = vrot.slane %v1904, %v2046
          %v2048 = vsel %vm1139, %v2047, %v2043
          %v2049 = vsel %vm1276, %v1922, %v1913
          %v2050 = vsel %vm1278, %v1931, %v2049
          %v2051 = vsel %vm1280, %v1940, %v2050
          %v2052 = vsel %vm1282, %v1949, %v2051
          %v2053 = vsel %vm1284, %v1958, %v2052
          %v2054 = vsel %vm1286, %v1967, %v2053
          %v2055 = vsel %vm1288, %v1976, %v2054
          %v2056 = vsel %vm1276, %v1994, %v1985
          %v2057 = vsel %vm1278, %v2003, %v2056
          %v2058 = vsel %vm1280, %v2012, %v2057
          %v2059 = vsel %vm1282, %v2021, %v2058
          %v2060 = vsel %vm1284, %v2030, %v2059
          %v2061 = vsel %vm1286, %v2039, %v2060
          %v2062 = vsel %vm1288, %v2048, %v2061
          %v2063 = vsel %vm1301, %v2055, 0
          %v2065 = vsel %vm1301, %v2062, 0
          %2067 = vmatprep.subr.mxu0 0.0
          %2068 = vmatpush1.msra.mxu0 %v1386
          %2069 = vmatprep.subr.mxu0 0.0
          %2070 = vmatpush1.msra.mxu0 %v1391
          %2071 = vmatprep.subr.mxu0 0.0
          %2072 = vmatpush1.msra.mxu0 0.0
          %2073 = vmatprep.subr.mxu0 0.0
          %2074 = vmatpush1.msra.mxu0 0.0
          %2075 = vmatprep.subr.mxu0 0.0
          %2076 = vmatpush1.msra.mxu0 0.0
          %2077 = vmatprep.subr.mxu0 0.0
          %2078 = vmatpush1.msra.mxu0 0.0
          %2079 = vmatprep.subr.mxu0 0.0
          %2080 = vmatpush1.msra.mxu0 0.0
          %2081 = vmatprep.subr.mxu0 0.0
          %2082 = vmatpush1.msra.mxu0 0.0
          %2083 = vmatprep.subr.mxu0 0.0
          %2084 = vmatpush1.msra.mxu0 0.0
          %2085 = vmatprep.subr.mxu0 0.0
          %2086 = vmatpush1.msra.mxu0 0.0
          %2087 = vmatprep.subr.mxu0 0.0
          %2088 = vmatpush1.msra.mxu0 0.0
          %2089 = vmatprep.subr.mxu0 0.0
          %2090 = vmatpush1.msra.mxu0 0.0
          %2091 = vmatprep.subr.mxu0 0.0
          %2092 = vmatpush1.msra.mxu0 0.0
          %2093 = vmatprep.subr.mxu0 0.0
          %2094 = vmatpush1.msra.mxu0 0.0
          %2095 = vmatprep.subr.mxu0 0.0
          %2096 = vmatpush1.msra.mxu0 0.0
          %2097 = vmatprep.subr.mxu0 0.0
          %2098 = vmatpush1.msra.mxu0 0.0
          %2099 = vmatprep.subr.mxu0 0.0
          %2100 = vmatpush1.msra.mxu0 0.0
          %2101 = vmatprep.subr.mxu0 0.0
          %2102 = vmatpush1.msra.mxu0 0.0
          %2103 = vmatprep.subr.mxu0 0.0
          %2104 = vmatpush1.msra.mxu0 0.0
          %2105 = vmatprep.subr.mxu0 0.0
          %2106 = vmatpush1.msra.mxu0 0.0
          %2107 = vmatprep.subr.mxu0 0.0
          %2108 = vmatpush1.msra.mxu0 0.0
          %2109 = vmatprep.subr.mxu0 0.0
          %2110 = vmatpush1.msra.mxu0 0.0
          %2111 = vmatprep.subr.mxu0 0.0
          %2112 = vmatpush1.msra.mxu0 0.0
          %2113 = vmatprep.subr.mxu0 0.0
          %2114 = vmatpush1.msra.mxu0 0.0
          %2115 = vmatprep.subr.mxu0 0.0
          %2116 = vmatpush1.msra.mxu0 0.0
          %2117 = vmatprep.subr.mxu0 0.0
          %2118 = vmatpush1.msra.mxu0 0.0
          %2119 = vmatprep.subr.mxu0 0.0
          %2120 = vmatpush1.msra.mxu0 0.0
          %2121 = vmatprep.subr.mxu0 0.0
          %2122 = vmatpush1.msra.mxu0 0.0
          %2123 = vmatprep.subr.mxu0 0.0
          %2124 = vmatpush1.msra.mxu0 0.0
          %2125 = vmatprep.subr.mxu0 0.0
          %2126 = vmatpush1.msra.mxu0 0.0
          %2127 = vmatprep.subr.mxu0 0.0
          %2128 = vmatpush1.msra.mxu0 0.0
          %2129 = vmatprep.subr.mxu0 0.0
          %2130 = vmatpush1.msra.mxu0 0.0
          %2131 = vmatprep.mubr.f32.mxu0 0.0
          %2132 = vmatmul.mubr.f32.gmra.mrb[0].mxu0 %v2063
          %v2133 = vpop.f32.mrb[0].mxu0
          %v2134 = vadd.f32 0.0, %v2133
          %v2135 = vpop.f32.mrb[0].mxu0
          %2136 = vmatprep.mubr.f32.mxu0 0.0
          %2137 = vmatmul.mubr.f32.gmra.mrb[0].mxu0 %v2065
          %v2138 = vpop.f32.mrb[0].mxu0
          %v2139 = vadd.f32 0.0, %v2138
          %v2140 = vpop.f32.mrb[0].mxu0
          %2141 = vdwg.mxu0
          %v2142 = vld [vmem:[#allocation4] sm:$0x1]
          %vm2143 = vcmask 261120
          %v2144 = vsel %vm2143, %v2134, 0.0
          %v2145 = vsel %vm2143, %v2139, 0.0
          %v2146 = vadd.f32 %v2144, %v2145
          %v2147 = vrot.slane %v2146, 4
          %v2148 = vadd.f32 %v2146, %v2147
          %v2149 = vrot.slane %v2148, 2
          %v2150 = vadd.f32 %v2148, %v2149
          %v2151 = vrot.slane %v2150, 1
          %v2152 = vadd.f32 %v2150, %v2151
          %v2153 = vadd.f32 %v2142, %v2152
          %vm2154 = vcmask 253952
          %2155 = vst.msk [vmem:[#allocation4] sm:$0x1] %vm2154, %v2153
          %v2156 = vld [vmem:[#allocation5] sm:$0x1]
          %v2157 = vmul.f32 %v2134, %v2134
          %v2158 = vmul.f32 %v2139, %v2139
          %v2159 = vsel %vm2143, %v2157, 0.0
          %v2160 = vsel %vm2143, %v2158, 0.0
          %v2161 = vadd.f32 %v2159, %v2160
          %v2162 = vrot.slane %v2161, 4
          %v2163 = vadd.f32 %v2161, %v2162
          %v2164 = vrot.slane %v2163, 2
          %v2165 = vadd.f32 %v2163, %v2164
          %v2166 = vrot.slane %v2165, 1
          %v2167 = vadd.f32 %v2165, %v2166
          %v2168 = vadd.f32 %v2156, %v2167
          %2169 = vst.msk [vmem:[#allocation5] sm:$0x1] %vm2154, %v2168
          %s2170 = scalar_lea.vmem [#allocation3], %s1299
          %2171 = vst.msk [vmem:[%s2170] sm:$0xff] %vm2143, %v2134
          %2172 = vst.msk [vmem:[%s2170 + $0x8] sm:$0xff] %vm2143, %v2139
        $region76: #{t_hop_forward.1} parent=67 // pred_fallthru
          _
        %p2173 = scmp.eq.s32.totalorder %s28, 1
        // Predicated region
        $region77: #{t_hop_forward.1} parent=67 // pred_check
          %p2174 = pneg %p2173
        $region78: #{t_hop_forward.1} parent=67 // pred_check_branch
          %2176 = sbr.rel (%p2174) target = $region80
        $region79: #{t_hop_forward.1} parent=67 // pred_region
          %s2177 = smul.u32 %s29, 16
          %s2178 = scalar_lea.vmem [#allocation3], %s2177
          %v2179 = vld [vmem:[%s2178] sm:$0xff]
          %v2180 = vld [vmem:[%s2178 + $0x8] sm:$0xff]
          %v2181 = vld [vmem:[#allocation4] sm:$0x1]
          %v2182 = vmul.f32 %v2181, 0.03125
          %v2183 = vld [vmem:[#allocation5] sm:$0x1]
          %v2184 = vmul.f32 %v2183, 0.03125
          %v2185 = vmul.f32 %v2182, %v2182
          %v2186 = vsub.f32 %v2184, %v2185
          %v2187 = vld [vmem:[%s8] sm:$0x1]
          %v2188 = vld [vmem:[%s9] sm:$0x1]
          %v2189 = vlaneseq
          %v2190 = vshrl.u32 %v2189, 7
          %v2191 = vsub.s32 0, %v2190
          %v2192 = vrot.slane %v2182, %v2191
          %v2193 = vsub.f32 %v2179, %v2192
          %v2194 = vsub.f32 %v2180, %v2192
          %v2195 = vadd.f32 %v2186, 1e-05
          %v2196 = vrsqrt.pop %v2195
          %v2197 = vlaneseq
          %v2198 = vshrl.u32 %v2197, 7
          %v2199 = vsub.s32 0, %v2198
          %v2200 = vrot.slane %v2196, %v2199
          %v2201 = vmul.f32 %v2193, %v2200
          %v2202 = vmul.f32 %v2194, %v2200
          %v2203 = vlaneseq
          %v2204 = vshrl.u32 %v2203, 7
          %v2205 = vsub.s32 0, %v2204
          %v2206 = vrot.slane %v2187, %v2205
          %v2207 = vmul.f32 %v2201, %v2206
          %v2208 = vmul.f32 %v2202, %v2206
          %v2209 = vlaneseq
          %v2210 = vshrl.u32 %v2209, 7
          %v2211 = vsub.s32 0, %v2210
          %v2212 = vrot.slane %v2188, %v2211
          %v2213 = vadd.f32 %v2207, %v2212
          %v2214 = vadd.f32 %v2208, %v2212
          %v2215 = vmax.f32 %v2213, 0.0
          %v2216 = vmax.f32 %v2214, 0.0
          %v2217 = vld [vmem:[%s6] sm:$0xff]
          %v2218 = vld [vmem:[%s6 + $0x8] sm:$0xff]
          %v2219 = vld [vmem:[%s6 + $0x10] sm:$0xff]
          %v2220 = vld [vmem:[%s6 + $0x18] sm:$0xff]
          %v2221 = vld [vmem:[%s7] sm:$0x1]
          %v2223 = vlaneseq
          %v2224 = vshrl.u32 %v2223, 7
          %v2225 = vsub.s32 0, %v2224
          %v2226 = vrot.slane %v2221, %v2225
          %vm2228 = vcmask 261120
          %v2230 = vsel %vm2228, %v2215, 0
          %v2233 = vsel %vm2228, %v2216, 0
          %2235 = vmatprep.subr.mxu0 0.0
          %2236 = vmatpush1.msra.mxu0 %v2217
          %2237 = vmatprep.subr.mxu0 0.0
          %2238 = vmatpush1.msra.mxu0 %v2218
          %2239 = vmatprep.subr.mxu0 0.0
          %2240 = vmatpush1.msra.mxu0 %v2219
          %2241 = vmatprep.subr.mxu0 0.0
          %2242 = vmatpush1.msra.mxu0 %v2220
          %2243 = vmatprep.subr.mxu0 0.0
          %2244 = vmatpush1.msra.mxu0 0.0
          %2245 = vmatprep.subr.mxu0 0.0
          %2246 = vmatpush1.msra.mxu0 0.0
          %2247 = vmatprep.subr.mxu0 0.0
          %2248 = vmatpush1.msra.mxu0 0.0
          %2249 = vmatprep.subr.mxu0 0.0
          %2250 = vmatpush1.msra.mxu0 0.0
          %2251 = vmatprep.subr.mxu0 0.0
          %2252 = vmatpush1.msra.mxu0 0.0
          %2253 = vmatprep.subr.mxu0 0.0
          %2254 = vmatpush1.msra.mxu0 0.0
          %2255 = vmatprep.subr.mxu0 0.0
          %2256 = vmatpush1.msra.mxu0 0.0
          %2257 = vmatprep.subr.mxu0 0.0
          %2258 = vmatpush1.msra.mxu0 0.0
          %2259 = vmatprep.subr.mxu0 0.0
          %2260 = vmatpush1.msra.mxu0 0.0
          %2261 = vmatprep.subr.mxu0 0.0
          %2262 = vmatpush1.msra.mxu0 0.0
          %2263 = vmatprep.subr.mxu0 0.0
          %2264 = vmatpush1.msra.mxu0 0.0
          %2265 = vmatprep.subr.mxu0 0.0
          %2266 = vmatpush1.msra.mxu0 0.0
          %2267 = vmatprep.subr.mxu0 0.0
          %2268 = vmatpush1.msra.mxu0 0.0
          %2269 = vmatprep.subr.mxu0 0.0
          %2270 = vmatpush1.msra.mxu0 0.0
          %2271 = vmatprep.subr.mxu0 0.0
          %2272 = vmatpush1.msra.mxu0 0.0
          %2273 = vmatprep.subr.mxu0 0.0
          %2274 = vmatpush1.msra.mxu0 0.0
          %2275 = vmatprep.subr.mxu0 0.0
          %2276 = vmatpush1.msra.mxu0 0.0
          %2277 = vmatprep.subr.mxu0 0.0
          %2278 = vmatpush1.msra.mxu0 0.0
          %2279 = vmatprep.subr.mxu0 0.0
          %2280 = vmatpush1.msra.mxu0 0.0
          %2281 = vmatprep.subr.mxu0 0.0
          %2282 = vmatpush1.msra.mxu0 0.0
          %2283 = vmatprep.subr.mxu0 0.0
          %2284 = vmatpush1.msra.mxu0 0.0
          %2285 = vmatprep.subr.mxu0 0.0
          %2286 = vmatpush1.msra.mxu0 0.0
          %2287 = vmatprep.subr.mxu0 0.0
          %2288 = vmatpush1.msra.mxu0 0.0
          %2289 = vmatprep.subr.mxu0 0.0
          %2290 = vmatpush1.msra.mxu0 0.0
          %2291 = vmatprep.subr.mxu0 0.0
          %2292 = vmatpush1.msra.mxu0 0.0
          %2293 = vmatprep.subr.mxu0 0.0
          %2294 = vmatpush1.msra.mxu0 0.0
          %2295 = vmatprep.subr.mxu0 0.0
          %2296 = vmatpush1.msra.mxu0 0.0
          %2297 = vmatprep.subr.mxu0 0.0
          %2298 = vmatpush1.msra.mxu0 0.0
          %2299 = vmatprep.mubr.f32.mxu0 0.0
          %2300 = vmatmul.mubr.f32.gmra.mrb[0].mxu0 %v2230
          %v2301 = vpop.f32.mrb[0].mxu0
          %v2302 = vadd.f32 %v2226, %v2301
          %v2303 = vpop.f32.mrb[0].mxu0
          %2304 = vmatprep.mubr.f32.mxu0 0.0
          %2305 = vmatmul.mubr.f32.gmra.mrb[0].mxu0 %v2233
          %v2306 = vpop.f32.mrb[0].mxu0
          %v2307 = vadd.f32 %v2226, %v2306
          %v2308 = vpop.f32.mrb[0].mxu0
          %2309 = vdwg.mxu0
          %s2310 = scalar_lea.vmem [#allocation2], %s2177
          %v2311 = vld [vmem:[%s2310] sm:$0xff]
          %v2312 = vld [vmem:[%s2310 + $0x8] sm:$0xff]
          %vm2313 = vcmask 130048
          %v2315 = vsel %vm2313, %v2311, 0
          %v2318 = vsel %vm2313, %v2312, 0
          %2320 = vmatprep.subr.mxu0 0.0
          %2321 = vmatpush1.msra.mxu0 %v2302
          %2322 = vmatprep.subr.mxu0 0.0
          %2323 = vmatpush1.msra.mxu0 %v2307
          %2324 = vmatprep.subr.mxu0 0.0
          %2325 = vmatpush1.msra.mxu0 0.0
          %2326 = vmatprep.subr.mxu0 0.0
          %2327 = vmatpush1.msra.mxu0 0.0
          %2328 = vmatprep.subr.mxu0 0.0
          %2329 = vmatpush1.msra.mxu0 0.0
          %2330 = vmatprep.subr.mxu0 0.0
          %2331 = vmatpush1.msra.mxu0 0.0
          %2332 = vmatprep.subr.mxu0 0.0
          %2333 = vmatpush1.msra.mxu0 0.0
          %2334 = vmatprep.subr.mxu0 0.0
          %2335 = vmatpush1.msra.mxu0 0.0
          %2336 = vmatprep.subr.mxu0 0.0
          %2337 = vmatpush1.msra.mxu0 0.0
          %2338 = vmatprep.subr.mxu0 0.0
          %2339 = vmatpush1.msra.mxu0 0.0
          %2340 = vmatprep.subr.mxu0 0.0
          %2341 = vmatpush1.msra.mxu0 0.0
          %2342 = vmatprep.subr.mxu0 0.0
          %2343 = vmatpush1.msra.mxu0 0.0
          %2344 = vmatprep.subr.mxu0 0.0
          %2345 = vmatpush1.msra.mxu0 0.0
          %2346 = vmatprep.subr.mxu0 0.0
          %2347 = vmatpush1.msra.mxu0 0.0
          %2348 = vmatprep.subr.mxu0 0.0
          %2349 = vmatpush1.msra.mxu0 0.0
          %2350 = vmatprep.subr.mxu0 0.0
          %2351 = vmatpush1.msra.mxu0 0.0
          %2352 = vmatprep.subr.mxu0 0.0
          %2353 = vmatpush1.msra.mxu0 0.0
          %2354 = vmatprep.subr.mxu0 0.0
          %2355 = vmatpush1.msra.mxu0 0.0
          %2356 = vmatprep.subr.mxu0 0.0
          %2357 = vmatpush1.msra.mxu0 0.0
          %2358 = vmatprep.subr.mxu0 0.0
          %2359 = vmatpush1.msra.mxu0 0.0
          %2360 = vmatprep.subr.mxu0 0.0
          %2361 = vmatpush1.msra.mxu0 0.0
          %2362 = vmatprep.subr.mxu0 0.0
          %2363 = vmatpush1.msra.mxu0 0.0
          %2364 = vmatprep.subr.mxu0 0.0
          %2365 = vmatpush1.msra.mxu0 0.0
          %2366 = vmatprep.subr.mxu0 0.0
          %2367 = vmatpush1.msra.mxu0 0.0
          %2368 = vmatprep.subr.mxu0 0.0
          %2369 = vmatpush1.msra.mxu0 0.0
          %2370 = vmatprep.subr.mxu0 0.0
          %2371 = vmatpush1.msra.mxu0 0.0
          %2372 = vmatprep.subr.mxu0 0.0
          %2373 = vmatpush1.msra.mxu0 0.0
          %2374 = vmatprep.subr.mxu0 0.0
          %2375 = vmatpush1.msra.mxu0 0.0
          %2376 = vmatprep.subr.mxu0 0.0
          %2377 = vmatpush1.msra.mxu0 0.0
          %2378 = vmatprep.subr.mxu0 0.0
          %2379 = vmatpush1.msra.mxu0 0.0
          %2380 = vmatprep.subr.mxu0 0.0
          %2381 = vmatpush1.msra.mxu0 0.0
          %2382 = vmatprep.subr.mxu0 0.0
          %2383 = vmatpush1.msra.mxu0 0.0
          %2384 = vmatprep.mubr.f32.mxu0 0.0
          %2385 = vmatmul.mubr.f32.gmra.mrb[0].mxu0 %v2315
          %v2386 = vpop.f32.mrb[0].mxu0
          %v2387 = vadd.f32 0.0, %v2386
          %v2388 = vpop.f32.mrb[0].mxu0
          %2389 = vmatprep.mubr.f32.mxu0 0.0
          %2390 = vmatmul.mubr.f32.gmra.mrb[0].mxu0 %v2318
          %v2391 = vpop.f32.mrb[0].mxu0
          %v2392 = vadd.f32 0.0, %v2391
          %v2393 = vpop.f32.mrb[0].mxu0
          %2394 = vdwg.mxu0
          %v2395 = vld [vmem:[#allocation4 + $0x1] sm:$0x1]
          %v2396 = vsel %vm2228, %v2387, 0.0
          %v2397 = vsel %vm2228, %v2392, 0.0
          %v2398 = vadd.f32 %v2396, %v2397
          %v2399 = vrot.slane %v2398, 4
          %v2400 = vadd.f32 %v2398, %v2399
          %v2401 = vrot.slane %v2400, 2
          %v2402 = vadd.f32 %v2400, %v2401
          %v2403 = vrot.slane %v2402, 1
          %v2404 = vadd.f32 %v2402, %v2403
          %v2405 = vadd.f32 %v2395, %v2404
          %vm2406 = vcmask 253952
          %2407 = vst.msk [vmem:[#allocation4 + $0x1] sm:$0x1] %vm2406, %v2405
          %v2408 = vld [vmem:[#allocation5 + $0x1] sm:$0x1]
          %v2409 = vmul.f32 %v2387, %v2387
          %v2410 = vmul.f32 %v2392, %v2392
          %v2411 = vsel %vm2228, %v2409, 0.0
          %v2412 = vsel %vm2228, %v2410, 0.0
          %v2413 = vadd.f32 %v2411, %v2412
          %v2414 = vrot.slane %v2413, 4
          %v2415 = vadd.f32 %v2413, %v2414
          %v2416 = vrot.slane %v2415, 2
          %v2417 = vadd.f32 %v2415, %v2416
          %v2418 = vrot.slane %v2417, 1
          %v2419 = vadd.f32 %v2417, %v2418
          %v2420 = vadd.f32 %v2408, %v2419
          %2421 = vst.msk [vmem:[#allocation5 + $0x1] sm:$0x1] %vm2406, %v2420
          %2422 = vst.msk [vmem:[%s2178] sm:$0xff] %vm2228, %v2387
          %2423 = vst.msk [vmem:[%s2178 + $0x8] sm:$0xff] %vm2228, %v2392
        $region80: #{t_hop_forward.1} parent=67 // pred_fallthru
          _
        %p2424 = scmp.eq.s32.totalorder %s28, 2
        // Predicated region
        $region81: #{t_hop_forward.1} parent=67 // pred_check
          %p2425 = pneg %p2424
        $region82: #{t_hop_forward.1} parent=67 // pred_check_branch
          %2427 = sbr.rel (%p2425) target = $region84
        $region83: #{t_hop_forward.1} parent=67 // pred_region
          %s2428 = smul.u32 %s29, 16
          %s2429 = scalar_lea.vmem [#allocation3], %s2428
          %v2430 = vld [vmem:[%s2429] sm:$0xff]
          %v2431 = vld [vmem:[%s2429 + $0x8] sm:$0xff]
          %v2432 = vld [vmem:[#allocation4 + $0x1] sm:$0x1]
          %v2433 = vmul.f32 %v2432, 0.03125
          %v2434 = vld [vmem:[#allocation5 + $0x1] sm:$0x1]
          %v2435 = vmul.f32 %v2434, 0.03125
          %v2436 = vmul.f32 %v2433, %v2433
          %v2437 = vsub.f32 %v2435, %v2436
          %v2438 = vld [vmem:[%s8 + $0x1] sm:$0x1]
          %v2439 = vld [vmem:[%s9 + $0x1] sm:$0x1]
          %v2440 = vlaneseq
          %v2441 = vshrl.u32 %v2440, 7
          %v2442 = vsub.s32 0, %v2441
          %v2443 = vrot.slane %v2433, %v2442
          %v2444 = vsub.f32 %v2430, %v2443
          %v2445 = vsub.f32 %v2431, %v2443
          %v2446 = vadd.f32 %v2437, 1e-05
          %v2447 = vrsqrt.pop %v2446
          %v2448 = vlaneseq
          %v2449 = vshrl.u32 %v2448, 7
          %v2450 = vsub.s32 0, %v2449
          %v2451 = vrot.slane %v2447, %v2450
          %v2452 = vmul.f32 %v2444, %v2451
          %v2453 = vmul.f32 %v2445, %v2451
          %v2454 = vlaneseq
          %v2455 = vshrl.u32 %v2454, 7
          %v2456 = vsub.s32 0, %v2455
          %v2457 = vrot.slane %v2438, %v2456
          %v2458 = vmul.f32 %v2452, %v2457
          %v2459 = vmul.f32 %v2453, %v2457
          %v2460 = vlaneseq
          %v2461 = vshrl.u32 %v2460, 7
          %v2462 = vsub.s32 0, %v2461
          %v2463 = vrot.slane %v2439, %v2462
          %v2464 = vadd.f32 %v2458, %v2463
          %v2465 = vadd.f32 %v2459, %v2463
          %v2466 = vmax.f32 %v2464, 0.0
          %v2467 = vmax.f32 %v2465, 0.0
          %vm2468 = vcmask 261120
          %v2469 = vsel %vm2468, %v2466, 0.0
          %v2470 = vsel %vm2468, %v2467, 0.0
          %v2471 = vadd.f32 %v2469, %v2470
          %v2472 = vrot.slane %v2471, 4
          %v2473 = vadd.f32 %v2471, %v2472
          %v2474 = vrot.slane %v2473, 2
          %v2475 = vadd.f32 %v2473, %v2474
          %v2476 = vrot.slane %v2475, 1
          %v2477 = vadd.f32 %v2475, %v2476
          %v2478 = vrcp.pop 16.0
          %v2479 = vmul.f32 %v2477, %v2478
          %v2480 = vld [vmem:[%s10] sm:$0xff]
          %v2481 = vld [vmem:[%s10 + $0x8] sm:$0xff]
          %v2482 = vld [vmem:[%s10 + $0x10] sm:$0xff]
          %v2483 = vld [vmem:[%s10 + $0x18] sm:$0xff]
          %v2484 = vld [vmem:[%s11] sm:$0x1]
          %v2486 = vsel %vm2468, %v2479, 0
          %2488 = vmatprep.subr.mxu0 0.0
          %2489 = vmatpush1.msra.mxu0 %v2480
          %2490 = vmatprep.subr.mxu0 0.0
          %2491 = vmatpush1.msra.mxu0 %v2481
          %2492 = vmatprep.subr.mxu0 0.0
          %2493 = vmatpush1.msra.mxu0 %v2482
          %2494 = vmatprep.subr.mxu0 0.0
          %2495 = vmatpush1.msra.mxu0 %v2483
          %2496 = vmatprep.subr.mxu0 0.0
          %2497 = vmatpush1.msra.mxu0 0.0
          %2498 = vmatprep.subr.mxu0 0.0
          %2499 = vmatpush1.msra.mxu0 0.0
          %2500 = vmatprep.subr.mxu0 0.0
          %2501 = vmatpush1.msra.mxu0 0.0
          %2502 = vmatprep.subr.mxu0 0.0
          %2503 = vmatpush1.msra.mxu0 0.0
          %2504 = vmatprep.subr.mxu0 0.0
          %2505 = vmatpush1.msra.mxu0 0.0
          %2506 = vmatprep.subr.mxu0 0.0
          %2507 = vmatpush1.msra.mxu0 0.0
          %2508 = vmatprep.subr.mxu0 0.0
          %2509 = vmatpush1.msra.mxu0 0.0
          %2510 = vmatprep.subr.mxu0 0.0
          %2511 = vmatpush1.msra.mxu0 0.0
          %2512 = vmatprep.subr.mxu0 0.0
          %2513 = vmatpush1.msra.mxu0 0.0
          %2514 = vmatprep.subr.mxu0 0.0
          %2515 = vmatpush1.msra.mxu0 0.0
          %2516 = vmatprep.subr.mxu0 0.0
          %2517 = vmatpush1.msra.mxu0 0.0
          %2518 = vmatprep.subr.mxu0 0.0
          %2519 = vmatpush1.msra.mxu0 0.0
          %2520 = vmatprep.subr.mxu0 0.0
          %2521 = vmatpush1.msra.mxu0 0.0
          %2522 = vmatprep.subr.mxu0 0.0
          %2523 = vmatpush1.msra.mxu0 0.0
          %2524 = vmatprep.subr.mxu0 0.0
          %2525 = vmatpush1.msra.mxu0 0.0
          %2526 = vmatprep.subr.mxu0 0.0
          %2527 = vmatpush1.msra.mxu0 0.0
          %2528 = vmatprep.subr.mxu0 0.0
          %2529 = vmatpush1.msra.mxu0 0.0
          %2530 = vmatprep.subr.mxu0 0.0
          %2531 = vmatpush1.msra.mxu0 0.0
          %2532 = vmatprep.subr.mxu0 0.0
          %2533 = vmatpush1.msra.mxu0 0.0
          %2534 = vmatprep.subr.mxu0 0.0
          %2535 = vmatpush1.msra.mxu0 0.0
          %2536 = vmatprep.subr.mxu0 0.0
          %2537 = vmatpush1.msra.mxu0 0.0
          %2538 = vmatprep.subr.mxu0 0.0
          %2539 = vmatpush1.msra.mxu0 0.0
          %2540 = vmatprep.subr.mxu0 0.0
          %2541 = vmatpush1.msra.mxu0 0.0
          %2542 = vmatprep.subr.mxu0 0.0
          %2543 = vmatpush1.msra.mxu0 0.0
          %2544 = vmatprep.subr.mxu0 0.0
          %2545 = vmatpush1.msra.mxu0 0.0
          %2546 = vmatprep.subr.mxu0 0.0
          %2547 = vmatpush1.msra.mxu0 0.0
          %2548 = vmatprep.subr.mxu0 0.0
          %2549 = vmatpush1.msra.mxu0 0.0
          %2550 = vmatprep.subr.mxu0 0.0
          %2551 = vmatpush1.msra.mxu0 0.0
          %2552 = vmatprep.mubr.f32.mxu0 0.0
          %2553 = vmatmul.mubr.f32.gmra.mrb[0].mxu0 %v2486
          %v2554 = vpop.f32.mrb[0].mxu0
          %v2555 = vadd.f32 %v2484, %v2554
          %v2556 = vpop.f32.mrb[0].mxu0
          %2557 = vdwg.mxu0
          %s2558 = scalar_lea.vmem [#allocation6], %s29
          %vm2559 = vcmask 57344
          %2560 = vst.msk [vmem:[%s2558] sm:$0x1] %vm2559, %v2555
        $region84: #{t_hop_forward.1} parent=67 // pred_fallthru
          _
        // Predicated region
        $region85: #{t_hop_forward.1} parent=67 // pred_check
          %p2561 = pneg %p340
        $region86: #{t_hop_forward.1} parent=67 // pred_check_branch
          %2563 = sbr.rel (%p2561) target = $region88
        $region87: #{t_hop_forward.1} parent=67 // pred_region
          %s2565 = ssub.s32 32, 32
          %2566 = vsyncadd [#allocation7], %s2565
          %s2568 = sshll.u32 [#allocation6], 4
          %s2569 = int_to_ptr.vmem [resolvable:$true] %s2568
          %2571 = dma.vmem_to_hbm [thread:$0]  %s2569, 32, %s12, [#allocation7]
        $region88: #{t_hop_forward.1} parent=67 // pred_fallthru
          _
        // Predicated region
        $region89: #{t_hop_forward.1} parent=67 // pred_check
          %p2572 = pneg %p340
        $region90: #{t_hop_forward.1} parent=67 // pred_check_branch
          %2574 = sbr.rel (%p2572) target = $region92
        $region91: #{t_hop_forward.1} parent=67 // pred_region
          %2575 = dma.done [#allocation7], 32
        $region92: #{t_hop_forward.1} parent=67 // pred_fallthru
          _
      $region68: #{t_hop_forward.1} parent=5 // pred_fallthru
        _
      %p2576 = scmp.le.s32.totalorder 2, %s19
      // Predicated region
      $region93: #{t_hop_forward.1} parent=5 // pred_check
        %p2577 = pneg %p2576
      $region94: #{t_hop_forward.1} parent=5 // pred_check_branch
        %2579 = sbr.rel (%p2577) target = $region96
      $region95: #{t_hop_forward.1} parent=5 // pred_region
        %s2580 = ssub.s32 %s19, 2
      $region96: #{t_hop_forward.1} parent=5 // pred_fallthru
        _
    $region6: #{t_hop_forward.1} parent=1 // loop_footer
      %s23 = sadd.s32 1, %s19
    $region7: #{t_hop_forward.1} parent=1 // loop_footer_branch
      %18 = sbr.rel target = $region3
    $region8: #{t_hop_forward.1} parent=1 // loop_exit
      _
    %2581 = vsyncpa [#allocation7], 1
    %s2582 = scalar_lea.sflag [#allocation7], 1
    %2583 = vsyncpa %s2582, 1

</llo_original>
